<compile_context>
chip_gen: v6e
topology: v6e:2x2x1
jax: 0.10.0
libtpu: 0.0.40
codegen_flags: <defaults>
</compile_context>

<pallas_src>
import math

import jax
import jax.numpy as jnp
from jax.experimental import pallas as pl
from jax.experimental.pallas import tpu as pltpu


CLS_PAD = 128  # classifier output padded from 2 -> 128 lanes (lane-dense store)

# Row layout of the packed [NUM_VEC_H, H] f32 vector operand.
(EMB_G, EMB_B, BQ, BK, BV, BO, LN1_G, LN1_B, B2, LN2_G, LN2_B) = range(11)
NUM_VEC_H = 11


# ----------------------------- helpers ------------------------------------ #

def _layernorm_f32(x, gamma, beta, eps=1e-12):
    # One-pass stats (mean & E[x^2]); f32 is ample at BERT activation scales.
    mean = jnp.mean(x, axis=-1, keepdims=True)
    mean_sq = jnp.mean(x * x, axis=-1, keepdims=True)
    var = mean_sq - mean * mean
    inv = jax.lax.rsqrt(var + eps)
    return (x - mean) * inv * gamma + beta


def _erf(x):
    # Abramowitz & Stegun 7.1.26 (|err| < 1.5e-7): exact-GELU parity using only
    # exp / mul / add / div / where, all of which lower cleanly in Mosaic.
    a1, a2, a3, a4, a5 = (0.254829592, -0.284496736, 1.421413741,
                          -1.453152027, 1.061405429)
    p = 0.3275911
    sgn = jnp.where(x >= 0.0, 1.0, -1.0)
    ax = jnp.abs(x)
    t = 1.0 / (1.0 + p * ax)
    poly = ((((a5 * t + a4) * t + a3) * t + a2) * t + a1) * t
    y = 1.0 - poly * jnp.exp(-ax * ax)
    return sgn * y


def _gelu_exact(x):
    # PyTorch nn.GELU (default) parity: exact erf formulation.
    return 0.5 * x * (1.0 + _erf(x * (1.0 / math.sqrt(2.0))))


def _physical_vmem_bytes():
    try:
        return int(pltpu.get_tpu_info().vmem_capacity_bytes)
    except Exception:                      # pragma: no cover
        return 128 * 1024 * 1024           # v5e/v6e default


def _pick_tb(batch, phys_vmem_bytes):
    # v7x: 64 MiB VMEM per TensorCore and 2 TCs/chip -> split the batch so the
    # "parallel" grid axis feeds both cores.  v5e/v6e: 1 TC -> whole batch in
    # one grid step (no per-step pipeline overhead, max rows into the MXU).
    if phys_vmem_bytes < 100 * 1024 * 1024 and batch % 2 == 0 and batch >= 2:
        return batch // 2
    return batch


def _const_weight_spec(shape):
    # Constant index map -> single-buffer the resident weights.
    try:
        return pl.BlockSpec(shape, lambda b: (0,) * len(shape),
                            pipeline_mode=pl.Buffered(1))
    except TypeError:  # TODO(synk): older jax without the pipeline_mode kwarg
        return pl.BlockSpec(shape, lambda b: (0,) * len(shape))


# -------------- fused encoder + CLS classifier kernel ---------------------- #

def encoder_cls_kernel(x_ref, mask_ref,
                       wq_ref, wk_ref, wv_ref, wo_ref,
                       w1_ref, w2_ref, clsw_ref,
                       vech_ref, b1_ref, clsb_ref,
                       logits_ref):
    # x_ref:      [TB, S, H] bf16 embeddings
    # mask_ref:   [TB, 1, S] f32 additive bias (0 / -1e9)
    # vech_ref:   [NUM_VEC_H, H] f32 packed bias / gamma / beta rows
    # logits_ref: [TB, 1, CLS_PAD] f32
    tb, seq, h = x_ref.shape
    m_rows = tb * seq
    n_pad = clsw_ref.shape[1]

    vh = vech_ref[...]                                   # [NUM_VEC_H, H] f32
    emb_g = vh[EMB_G:EMB_G + 1, :]
    emb_b = vh[EMB_B:EMB_B + 1, :]
    bq = vh[BQ:BQ + 1, :]        # NOTE: carries the folded 1/sqrt(H) scale
    bk = vh[BK:BK + 1, :]
    bv = vh[BV:BV + 1, :]
    bo = vh[BO:BO + 1, :]
    ln1_g = vh[LN1_G:LN1_G + 1, :]
    ln1_b = vh[LN1_B:LN1_B + 1, :]
    b2 = vh[B2:B2 + 1, :]
    ln2_g = vh[LN2_G:LN2_G + 1, :]
    ln2_b = vh[LN2_B:LN2_B + 1, :]

    # ---- embedding layernorm over all tokens (needed for K/V) ---- #
    xf3 = x_ref[...].astype(jnp.float32)                  # [TB, S, H]
    x_ln3 = _layernorm_f32(xf3, emb_g, emb_b)             # [TB, S, H] f32
    x_ln_bf = x_ln3.reshape(m_rows, h).astype(jnp.bfloat16)

    # ---- K / V over all tokens (bf16 matmuls, f32 accumulation) ---- #
    k = jnp.dot(x_ln_bf, wk_ref[...],
                preferred_element_type=jnp.float32) + bk   # [M, H]
    v = jnp.dot(x_ln_bf, wv_ref[...],
                preferred_element_type=jnp.float32) + bv   # [M, H]
    k3 = k.reshape(tb, seq, h).astype(jnp.bfloat16)
    v3 = v.reshape(tb, seq, h).astype(jnp.bfloat16)

    # ---- Q only for the CLS row (only the CLS logit is ever consumed) ---- #
    cls_ln = x_ln3[:, 0, :]                                # [TB, H] f32
    q_cls = jnp.dot(cls_ln.astype(jnp.bfloat16), wq_ref[...],
                    preferred_element_type=jnp.float32) + bq   # [TB, H]
    q3 = q_cls.reshape(tb, 1, h).astype(jnp.bfloat16)

    # 1/sqrt(H) already folded into wq/bq -> no VALU pass over the scores.
    scores = jnp.einsum('bqd,bkd->bqk', q3, k3,
                        preferred_element_type=jnp.float32)    # [TB, 1, S]
    scores = scores + mask_ref[...]

    s_max = jnp.max(scores, axis=-1, keepdims=True)
    p = jnp.exp(scores - s_max)
    denom = jnp.sum(p, axis=-1, keepdims=True)
    attn = p / denom                                       # exact (tiny tensor)

    ctx = jnp.einsum('bqk,bkd->bqd', attn.astype(jnp.bfloat16), v3,
                     preferred_element_type=jnp.float32)       # [TB, 1, H]
    ctx2 = ctx.reshape(tb, h)                                  # [TB, H]

    # ---- everything below runs on the [TB, H] CLS slab only ---- #
    attn_out = jnp.dot(ctx2.astype(jnp.bfloat16), wo_ref[...],
                       preferred_element_type=jnp.float32) + bo

    h1 = _layernorm_f32(cls_ln + attn_out, ln1_g, ln1_b)       # [TB, H]

    ffn = jnp.dot(h1.astype(jnp.bfloat16), w1_ref[...],
                  preferred_element_type=jnp.float32) + b1_ref[...]  # [TB, F]
    ffn = _gelu_exact(ffn)
    ffn2 = jnp.dot(ffn.astype(jnp.bfloat16), w2_ref[...],
                   preferred_element_type=jnp.float32) + b2

    h2 = _layernorm_f32(h1 + ffn2, ln2_g, ln2_b)               # [TB, H]

    # Dropout(p=0.1) is identity in eval mode -> Linear(H, 2) padded to 128.
    logits = jnp.dot(h2.astype(jnp.bfloat16), clsw_ref[...],
                     preferred_element_type=jnp.float32) + clsb_ref[...]
    logits_ref[...] = logits.reshape(tb, 1, n_pad)


def encoder_cls_forward(x_emb, mask_bias, p, *, tb=None):
    B, S, H = x_emb.shape
    F = p["w1"].shape[1]
    n_pad = p["cls_w"].shape[1]

    phys_vmem = _physical_vmem_bytes()
    if tb is None:
        tb = _pick_tb(B, phys_vmem)
    assert B % tb == 0, "batch must be divisible by the batch tile"

    weights = [p["wq"], p["wk"], p["wv"], p["wo"],
               p["w1"], p["w2"], p["cls_w"],
               p["vec_h"], p["b1"], p["cls_b"]]
    weight_specs = [_const_weight_spec(w.shape) for w in weights]

    # VMEM budget: single-buffered weights + double-buffered grid blocks +
    # f32 working set (K/V over all tokens, CLS slab intermediates).
    m_rows = tb * S
    weight_bytes = sum(int(w.size) * w.dtype.itemsize for w in weights)
    block_bytes = 2 * (tb * S * H * 2 + tb * S * 4 + tb * n_pad * 4)
    work_bytes = (6 * m_rows * H * 4            # x_ln, k, v (f32 + bf16 copies)
                  + 6 * tb * max(H, F) * 4      # CLS slab intermediates
                  + 4 * tb * S * 4)             # scores / softmax
    est = weight_bytes + block_bytes + work_bytes
    vmem_cap = int(0.6 * phys_vmem)
    vmem_bytes = int(min(max(est, 16 * 1024 * 1024), vmem_cap))

    return pl.pallas_call(
        encoder_cls_kernel,
        out_shape=jax.ShapeDtypeStruct((B, 1, n_pad), jnp.float32),
        grid_spec=pltpu.PrefetchScalarGridSpec(
            num_scalar_prefetch=0,
            grid=(B // tb,),
            in_specs=[pl.BlockSpec((tb, S, H), lambda b: (b, 0, 0)),
                      pl.BlockSpec((tb, 1, S), lambda b: (b, 0, 0))]
                     + weight_specs,
            out_specs=pl.BlockSpec((tb, 1, n_pad), lambda b: (b, 0, 0)),
        ),
        compiler_params=pltpu.CompilerParams(
            dimension_semantics=("parallel",),
            vmem_limit_bytes=vmem_bytes),
    )(x_emb, mask_bias, *weights)


# ------------------------------ full model --------------------------------- #

def init_params(key, vocab, max_seq, hidden, ffn, cls_pad=CLS_PAD):
    keys = jax.random.split(key, 10)
    s = 0.02
    attn_scale = 1.0 / math.sqrt(hidden)

    def nw(i, shape, mult=1.0):
        return (mult * s * jax.random.normal(keys[i], shape)).astype(jnp.bfloat16)

    def nf(i, shape):
        return (s * jax.random.normal(keys[i], shape)).astype(jnp.float32)

    # Packed [NUM_VEC_H, H] f32 vector operand: layernorm gammas = 1, all
    # biases / betas = 0.  NOTE: the BQ row must carry the folded attention
    # scale if a nonzero query bias is ever used.
    vec_h = jnp.zeros((NUM_VEC_H, hidden), jnp.float32)
    vec_h = vec_h.at[EMB_G].set(1.0).at[LN1_G].set(1.0).at[LN2_G].set(1.0)

    cls_w = jnp.zeros((hidden, cls_pad), jnp.float32)
    cls_w = cls_w.at[:, :2].set(s * jax.random.normal(keys[9], (hidden, 2)))

    return {
        # embedding tables stay f32 (lookup is XLA glue; summed then cast bf16)
        "word_emb": nf(0, (vocab, hidden)),
        "pos_emb":  nf(1, (max_seq, hidden)),
        "type_emb": nf(2, (2, hidden)),
        # matmul weights bf16; 1/sqrt(H) attention scale folded into wq
        "wq": nw(3, (hidden, hidden), mult=attn_scale),
        "wk": nw(4, (hidden, hidden)),
        "wv": nw(5, (hidden, hidden)),
        "wo": nw(6, (hidden, hidden)),
        "w1": nw(7, (hidden, ffn)),
        "w2": nw(8, (ffn, hidden)),
        "cls_w": cls_w.astype(jnp.bfloat16),
        # packed small vectors + remaining biases (f32)
        "vec_h": vec_h,
        "b1": jnp.zeros((1, ffn), jnp.float32),
        "cls_b": jnp.zeros((1, cls_pad), jnp.float32),
    }


def my_model_forward(params, input_ids, attention_mask, token_type_ids,
                     labels=None, *, tb=None):
    B, S = input_ids.shape
    # --- embedding lookup (XLA glue) ---
    x_emb = (jnp.take(params["word_emb"], input_ids, axis=0)
             + params["pos_emb"][None, :S, :]
             + jnp.take(params["type_emb"], token_type_ids, axis=0))
    x_emb = x_emb.astype(jnp.bfloat16)                              # [B, S, H]
    mask_bias = ((1.0 - attention_mask.astype(jnp.float32))
                 * -1e9).reshape(B, 1, S)                           # f32

    # --- fused encoder + CLS classifier (Pallas hot path) ---
    logits_pad = encoder_cls_forward(x_emb, mask_bias, params, tb=tb)
    logits = logits_pad[:, 0, :2]                                   # [B, 2]

    # --- cross-entropy on [B, 2]: plain XLA glue (too small for a kernel) ---
    loss = None
    if labels is not None:
        logp = jax.nn.log_softmax(logits, axis=-1)
        loss = -jnp.mean(jnp.take_along_axis(logp, labels[:, None], axis=-1))
    return {"logits": logits, "loss": loss}


# --------------------------------- main ------------------------------------ #

if __name__ == "__main__":
    # Lane-dense toy config: H and F multiples of 128.  The batch tile is
    # picked per TPU generation (whole batch on v5e/v6e, split in two on v7x).
    B, S, H, F, VOCAB = 4, 8, 128, 256, 50

    key = jax.random.PRNGKey(0)
    k_param, k_ids, _ = jax.random.split(key, 3)

    params = init_params(k_param, VOCAB, S, H, F)

    input_ids = jax.random.randint(k_ids, (B, S), 0, VOCAB, dtype=jnp.int32)
    attention_mask = jnp.array([[1] * S,
                                [1] * (S - 2) + [0] * 2,
                                [1] * S,
                                [1] * (S - 3) + [0] * 3], dtype=jnp.int32)
    token_type_ids = jnp.zeros((B, S), dtype=jnp.int32)
    labels = jnp.array([0, 1, 1, 0], dtype=jnp.int32)

    out = my_model_forward(params, input_ids, attention_mask,
                           token_type_ids, labels)
    jax.block_until_ready(out["logits"])
    jax.block_until_ready(out["loss"])

    assert out["logits"].shape == (B, 2)
    assert out["loss"].shape == ()
    assert bool(jnp.isfinite(out["loss"]))
    assert bool(jnp.all(jnp.isfinite(out["logits"])))

    # no-labels path (loss must be None, logits identical)
    out2 = my_model_forward(params, input_ids, attention_mask,
                            token_type_ids, None)
    jax.block_until_ready(out2["logits"])
    assert out2["loss"] is None
    assert bool(jnp.all(out2["logits"] == out["logits"]))

    print("KERNEL_OK")
</pallas_src>

<mosaic_0001>
module attributes {stable_mosaic.version = 11 : i64} {
  func.func @encoder_cls_kernel(%arg0: i32, %arg1: memref<4x8x128xbf16, #tpu.memory_space<vmem>>, %arg2: memref<4x1x8xf32, #tpu.memory_space<vmem>>, %arg3: memref<128x128xbf16, #tpu.memory_space<vmem>>, %arg4: memref<128x128xbf16, #tpu.memory_space<vmem>>, %arg5: memref<128x128xbf16, #tpu.memory_space<vmem>>, %arg6: memref<128x128xbf16, #tpu.memory_space<vmem>>, %arg7: memref<128x256xbf16, #tpu.memory_space<vmem>>, %arg8: memref<256x128xbf16, #tpu.memory_space<vmem>>, %arg9: memref<128x128xbf16, #tpu.memory_space<vmem>>, %arg10: memref<11x128xf32, #tpu.memory_space<vmem>>, %arg11: memref<1x256xf32, #tpu.memory_space<vmem>>, %arg12: memref<1x128xf32, #tpu.memory_space<vmem>>, %arg13: memref<4x1x128xf32, #tpu.memory_space<vmem>>) attributes {dimension_semantics = [#tpu.dimension_semantics<parallel>], iteration_bounds = array<i64: 1>, scalar_prefetch = 0 : i64, scratch_operands = 0 : i64, tpu.core_type = #tpu.core_type<tc>, window_params = [{transform_indices = @transform_0, window_bounds = array<i64: 4, 8, 128>}, {transform_indices = @transform_1, window_bounds = array<i64: 4, 1, 8>}, {pipeline_mode = #tpu.pipeline_mode<synchronous>, transform_indices = @transform_2, window_bounds = array<i64: 128, 128>}, {pipeline_mode = #tpu.pipeline_mode<synchronous>, transform_indices = @transform_3, window_bounds = array<i64: 128, 128>}, {pipeline_mode = #tpu.pipeline_mode<synchronous>, transform_indices = @transform_4, window_bounds = array<i64: 128, 128>}, {pipeline_mode = #tpu.pipeline_mode<synchronous>, transform_indices = @transform_5, window_bounds = array<i64: 128, 128>}, {pipeline_mode = #tpu.pipeline_mode<synchronous>, transform_indices = @transform_6, window_bounds = array<i64: 128, 256>}, {pipeline_mode = #tpu.pipeline_mode<synchronous>, transform_indices = @transform_7, window_bounds = array<i64: 256, 128>}, {pipeline_mode = #tpu.pipeline_mode<synchronous>, transform_indices = @transform_8, window_bounds = array<i64: 128, 128>}, {pipeline_mode = #tpu.pipeline_mode<synchronous>, transform_indices = @transform_9, window_bounds = array<i64: 11, 128>}, {pipeline_mode = #tpu.pipeline_mode<synchronous>, transform_indices = @transform_10, window_bounds = array<i64: 1, 256>}, {pipeline_mode = #tpu.pipeline_mode<synchronous>, transform_indices = @transform_11, window_bounds = array<i64: 1, 128>}, {transform_indices = @transform_12, window_bounds = array<i64: 4, 1, 128>}]} {
    %c0 = arith.constant 0 : index
    %c0_0 = arith.constant 0 : index
    %0 = vector.load %arg10[%c0, %c0_0] : memref<11x128xf32, #tpu.memory_space<vmem>>, vector<11x128xf32>
    %1 = vector.extract_strided_slice %0 {offsets = [0, 0], sizes = [1, 128], strides = [1, 1]} : vector<11x128xf32> to vector<1x128xf32>
    %2 = vector.extract_strided_slice %0 {offsets = [1, 0], sizes = [1, 128], strides = [1, 1]} : vector<11x128xf32> to vector<1x128xf32>
    %3 = vector.extract_strided_slice %0 {offsets = [2, 0], sizes = [1, 128], strides = [1, 1]} : vector<11x128xf32> to vector<1x128xf32>
    %4 = vector.extract_strided_slice %0 {offsets = [3, 0], sizes = [1, 128], strides = [1, 1]} : vector<11x128xf32> to vector<1x128xf32>
    %5 = vector.extract_strided_slice %0 {offsets = [4, 0], sizes = [1, 128], strides = [1, 1]} : vector<11x128xf32> to vector<1x128xf32>
    %6 = vector.extract_strided_slice %0 {offsets = [5, 0], sizes = [1, 128], strides = [1, 1]} : vector<11x128xf32> to vector<1x128xf32>
    %7 = vector.extract_strided_slice %0 {offsets = [6, 0], sizes = [1, 128], strides = [1, 1]} : vector<11x128xf32> to vector<1x128xf32>
    %8 = vector.extract_strided_slice %0 {offsets = [7, 0], sizes = [1, 128], strides = [1, 1]} : vector<11x128xf32> to vector<1x128xf32>
    %9 = vector.extract_strided_slice %0 {offsets = [8, 0], sizes = [1, 128], strides = [1, 1]} : vector<11x128xf32> to vector<1x128xf32>
    %10 = vector.extract_strided_slice %0 {offsets = [9, 0], sizes = [1, 128], strides = [1, 1]} : vector<11x128xf32> to vector<1x128xf32>
    %11 = vector.extract_strided_slice %0 {offsets = [10, 0], sizes = [1, 128], strides = [1, 1]} : vector<11x128xf32> to vector<1x128xf32>
    %c0_1 = arith.constant 0 : index
    %c0_2 = arith.constant 0 : index
    %c0_3 = arith.constant 0 : index
    %12 = vector.load %arg1[%c0_1, %c0_2, %c0_3] : memref<4x8x128xbf16, #tpu.memory_space<vmem>>, vector<4x8x128xbf16>
    %13 = arith.extf %12 : vector<4x8x128xbf16> to vector<4x8x128xf32>
    %cst = arith.constant dense<0.000000e+00> : vector<4x8xf32>
    %14 = vector.multi_reduction <add>, %13, %cst [2] : vector<4x8x128xf32> to vector<4x8xf32>
    %15 = vector.shape_cast %14 : vector<4x8xf32> to vector<4x8x1xf32>
    %cst_4 = arith.constant 1.280000e+02 : f32
    %16 = vector.broadcast %cst_4 : f32 to vector<4x8x1xf32>
    %17 = arith.divf %15, %16 : vector<4x8x1xf32>
    %18 = arith.mulf %13, %13 : vector<4x8x128xf32>
    %cst_5 = arith.constant dense<0.000000e+00> : vector<4x8xf32>
    %19 = vector.multi_reduction <add>, %18, %cst_5 [2] : vector<4x8x128xf32> to vector<4x8xf32>
    %20 = vector.shape_cast %19 : vector<4x8xf32> to vector<4x8x1xf32>
    %cst_6 = arith.constant 1.280000e+02 : f32
    %21 = vector.broadcast %cst_6 : f32 to vector<4x8x1xf32>
    %22 = arith.divf %20, %21 : vector<4x8x1xf32>
    %23 = arith.mulf %17, %17 : vector<4x8x1xf32>
    %24 = arith.subf %22, %23 : vector<4x8x1xf32>
    %cst_7 = arith.constant 9.99999996E-13 : f32
    %25 = vector.broadcast %cst_7 : f32 to vector<4x8x1xf32>
    %26 = arith.addf %24, %25 : vector<4x8x1xf32>
    %27 = math.rsqrt %26 : vector<4x8x1xf32>
    %28 = vector.broadcast %17 : vector<4x8x1xf32> to vector<4x8x128xf32>
    %29 = arith.subf %13, %28 : vector<4x8x128xf32>
    %30 = vector.broadcast %27 : vector<4x8x1xf32> to vector<4x8x128xf32>
    %31 = arith.mulf %29, %30 : vector<4x8x128xf32>
    %32 = vector.shape_cast %1 : vector<1x128xf32> to vector<1x1x128xf32>
    %33 = vector.broadcast %32 : vector<1x1x128xf32> to vector<4x8x128xf32>
    %34 = arith.mulf %31, %33 : vector<4x8x128xf32>
    %35 = vector.shape_cast %2 : vector<1x128xf32> to vector<1x1x128xf32>
    %36 = vector.broadcast %35 : vector<1x1x128xf32> to vector<4x8x128xf32>
    %37 = arith.addf %34, %36 : vector<4x8x128xf32>
    %38 = vector.shape_cast %37 : vector<4x8x128xf32> to vector<32x128xf32>
    %39 = arith.truncf %38 : vector<32x128xf32> to vector<32x128xbf16>
    %c0_8 = arith.constant 0 : index
    %c0_9 = arith.constant 0 : index
    %40 = vector.load %arg4[%c0_8, %c0_9] : memref<128x128xbf16, #tpu.memory_space<vmem>>, vector<128x128xbf16>
    %cst_10 = arith.constant dense<0.000000e+00> : vector<32x128xf32>
    %41 = tpu.matmul %39, %40, %cst_10 {dimension_numbers = #tpu.dot_dimension_numbers<[1], [0], [0], [1], [0, 0, 1, 1], [], []>} : vector<32x128xbf16>, vector<128x128xbf16>, vector<32x128xf32> -> vector<32x128xf32>
    %42 = vector.broadcast %4 : vector<1x128xf32> to vector<32x128xf32>
    %43 = arith.addf %41, %42 : vector<32x128xf32>
    %c0_11 = arith.constant 0 : index
    %c0_12 = arith.constant 0 : index
    %44 = vector.load %arg5[%c0_11, %c0_12] : memref<128x128xbf16, #tpu.memory_space<vmem>>, vector<128x128xbf16>
    %cst_13 = arith.constant dense<0.000000e+00> : vector<32x128xf32>
    %45 = tpu.matmul %39, %44, %cst_13 {dimension_numbers = #tpu.dot_dimension_numbers<[1], [0], [0], [1], [0, 0, 1, 1], [], []>} : vector<32x128xbf16>, vector<128x128xbf16>, vector<32x128xf32> -> vector<32x128xf32>
    %46 = vector.broadcast %5 : vector<1x128xf32> to vector<32x128xf32>
    %47 = arith.addf %45, %46 : vector<32x128xf32>
    %48 = vector.shape_cast %43 : vector<32x128xf32> to vector<4x8x128xf32>
    %49 = arith.truncf %48 : vector<4x8x128xf32> to vector<4x8x128xbf16>
    %50 = vector.shape_cast %47 : vector<32x128xf32> to vector<4x8x128xf32>
    %51 = arith.truncf %50 : vector<4x8x128xf32> to vector<4x8x128xbf16>
    %52 = vector.extract_strided_slice %37 {offsets = [0, 0, 0], sizes = [4, 1, 128], strides = [1, 1, 1]} : vector<4x8x128xf32> to vector<4x1x128xf32>
    %53 = vector.shape_cast %52 : vector<4x1x128xf32> to vector<4x128xf32>
    %54 = arith.truncf %53 : vector<4x128xf32> to vector<4x128xbf16>
    %c0_14 = arith.constant 0 : index
    %c0_15 = arith.constant 0 : index
    %55 = vector.load %arg3[%c0_14, %c0_15] : memref<128x128xbf16, #tpu.memory_space<vmem>>, vector<128x128xbf16>
    %cst_16 = arith.constant dense<0.000000e+00> : vector<4x128xf32>
    %56 = tpu.matmul %54, %55, %cst_16 {dimension_numbers = #tpu.dot_dimension_numbers<[1], [0], [0], [1], [0, 0, 1, 1], [], []>} : vector<4x128xbf16>, vector<128x128xbf16>, vector<4x128xf32> -> vector<4x128xf32>
    %57 = vector.broadcast %3 : vector<1x128xf32> to vector<4x128xf32>
    %58 = arith.addf %56, %57 : vector<4x128xf32>
    %59 = vector.shape_cast %58 : vector<4x128xf32> to vector<4x1x128xf32>
    %60 = arith.truncf %59 : vector<4x1x128xf32> to vector<4x1x128xbf16>
    "tpu.trace_start"() <{level = 10 : i32, message = "bqd,bkd->bqk"}> : () -> ()
    %cst_17 = arith.constant dense<0.000000e+00> : vector<4x1x8xf32>
    %61 = tpu.matmul %60, %49, %cst_17 {dimension_numbers = #tpu.dot_dimension_numbers<[2], [2], [1], [1], [0, 0, 0, 1, 1, 1], [0], [0]>} : vector<4x1x128xbf16>, vector<4x8x128xbf16>, vector<4x1x8xf32> -> vector<4x1x8xf32>
    "tpu.trace_stop"() : () -> ()
    %c0_18 = arith.constant 0 : index
    %c0_19 = arith.constant 0 : index
    %c0_20 = arith.constant 0 : index
    %62 = vector.load %arg2[%c0_18, %c0_19, %c0_20] : memref<4x1x8xf32, #tpu.memory_space<vmem>>, vector<4x1x8xf32>
    %63 = arith.addf %61, %62 : vector<4x1x8xf32>
    %cst_21 = arith.constant dense<0xFF800000> : vector<4x1xf32>
    %64 = vector.multi_reduction <maximumf>, %63, %cst_21 [2] : vector<4x1x8xf32> to vector<4x1xf32>
    %65 = vector.shape_cast %64 : vector<4x1xf32> to vector<4x1x1xf32>
    %66 = vector.broadcast %65 : vector<4x1x1xf32> to vector<4x1x8xf32>
    %67 = arith.subf %63, %66 : vector<4x1x8xf32>
    %68 = math.exp %67 : vector<4x1x8xf32>
    %cst_22 = arith.constant dense<0.000000e+00> : vector<4x1xf32>
    %69 = vector.multi_reduction <add>, %68, %cst_22 [2] : vector<4x1x8xf32> to vector<4x1xf32>
    %70 = vector.shape_cast %69 : vector<4x1xf32> to vector<4x1x1xf32>
    %71 = vector.broadcast %70 : vector<4x1x1xf32> to vector<4x1x8xf32>
    %72 = arith.divf %68, %71 : vector<4x1x8xf32>
    %73 = arith.truncf %72 : vector<4x1x8xf32> to vector<4x1x8xbf16>
    "tpu.trace_start"() <{level = 10 : i32, message = "bqk,bkd->bqd"}> : () -> ()
    %cst_23 = arith.constant dense<0.000000e+00> : vector<4x1x128xf32>
    %74 = tpu.matmul %73, %51, %cst_23 {dimension_numbers = #tpu.dot_dimension_numbers<[2], [1], [1], [2], [0, 0, 0, 1, 1, 2], [0], [0]>} : vector<4x1x8xbf16>, vector<4x8x128xbf16>, vector<4x1x128xf32> -> vector<4x1x128xf32>
    "tpu.trace_stop"() : () -> ()
    %75 = vector.shape_cast %74 : vector<4x1x128xf32> to vector<4x128xf32>
    %76 = arith.truncf %75 : vector<4x128xf32> to vector<4x128xbf16>
    %c0_24 = arith.constant 0 : index
    %c0_25 = arith.constant 0 : index
    %77 = vector.load %arg6[%c0_24, %c0_25] : memref<128x128xbf16, #tpu.memory_space<vmem>>, vector<128x128xbf16>
    %cst_26 = arith.constant dense<0.000000e+00> : vector<4x128xf32>
    %78 = tpu.matmul %76, %77, %cst_26 {dimension_numbers = #tpu.dot_dimension_numbers<[1], [0], [0], [1], [0, 0, 1, 1], [], []>} : vector<4x128xbf16>, vector<128x128xbf16>, vector<4x128xf32> -> vector<4x128xf32>
    %79 = vector.broadcast %6 : vector<1x128xf32> to vector<4x128xf32>
    %80 = arith.addf %78, %79 : vector<4x128xf32>
    %81 = arith.addf %53, %80 : vector<4x128xf32>
    %cst_27 = arith.constant dense<0.000000e+00> : vector<4xf32>
    %82 = vector.multi_reduction <add>, %81, %cst_27 [1] : vector<4x128xf32> to vector<4xf32>
    %83 = vector.shape_cast %82 : vector<4xf32> to vector<4x1xf32>
    %cst_28 = arith.constant 1.280000e+02 : f32
    %84 = vector.broadcast %cst_28 : f32 to vector<4x1xf32>
    %85 = arith.divf %83, %84 : vector<4x1xf32>
    %86 = arith.mulf %81, %81 : vector<4x128xf32>
    %cst_29 = arith.constant dense<0.000000e+00> : vector<4xf32>
    %87 = vector.multi_reduction <add>, %86, %cst_29 [1] : vector<4x128xf32> to vector<4xf32>
    %88 = vector.shape_cast %87 : vector<4xf32> to vector<4x1xf32>
    %cst_30 = arith.constant 1.280000e+02 : f32
    %89 = vector.broadcast %cst_30 : f32 to vector<4x1xf32>
    %90 = arith.divf %88, %89 : vector<4x1xf32>
    %91 = arith.mulf %85, %85 : vector<4x1xf32>
    %92 = arith.subf %90, %91 : vector<4x1xf32>
    %cst_31 = arith.constant 9.99999996E-13 : f32
    %93 = vector.broadcast %cst_31 : f32 to vector<4x1xf32>
    %94 = arith.addf %92, %93 : vector<4x1xf32>
    %95 = math.rsqrt %94 : vector<4x1xf32>
    %96 = vector.broadcast %85 : vector<4x1xf32> to vector<4x128xf32>
    %97 = arith.subf %81, %96 : vector<4x128xf32>
    %98 = vector.broadcast %95 : vector<4x1xf32> to vector<4x128xf32>
    %99 = arith.mulf %97, %98 : vector<4x128xf32>
    %100 = vector.broadcast %7 : vector<1x128xf32> to vector<4x128xf32>
    %101 = arith.mulf %99, %100 : vector<4x128xf32>
    %102 = vector.broadcast %8 : vector<1x128xf32> to vector<4x128xf32>
    %103 = arith.addf %101, %102 : vector<4x128xf32>
    %104 = arith.truncf %103 : vector<4x128xf32> to vector<4x128xbf16>
    %c0_32 = arith.constant 0 : index
    %c0_33 = arith.constant 0 : index
    %105 = vector.load %arg7[%c0_32, %c0_33] : memref<128x256xbf16, #tpu.memory_space<vmem>>, vector<128x256xbf16>
    %cst_34 = arith.constant dense<0.000000e+00> : vector<4x256xf32>
    %106 = tpu.matmul %104, %105, %cst_34 {dimension_numbers = #tpu.dot_dimension_numbers<[1], [0], [0], [1], [0, 0, 1, 1], [], []>} : vector<4x128xbf16>, vector<128x256xbf16>, vector<4x256xf32> -> vector<4x256xf32>
    %c0_35 = arith.constant 0 : index
    %c0_36 = arith.constant 0 : index
    %107 = vector.load %arg11[%c0_35, %c0_36] : memref<1x256xf32, #tpu.memory_space<vmem>>, vector<1x256xf32>
    %108 = vector.broadcast %107 : vector<1x256xf32> to vector<4x256xf32>
    %109 = arith.addf %106, %108 : vector<4x256xf32>
    %cst_37 = arith.constant 5.000000e-01 : f32
    %110 = vector.broadcast %cst_37 : f32 to vector<4x256xf32>
    %111 = arith.mulf %110, %109 : vector<4x256xf32>
    %cst_38 = arith.constant 0.707106769 : f32
    %112 = vector.broadcast %cst_38 : f32 to vector<4x256xf32>
    %113 = arith.mulf %109, %112 : vector<4x256xf32>
    %cst_39 = arith.constant 0.000000e+00 : f32
    %114 = vector.broadcast %cst_39 : f32 to vector<4x256xf32>
    %115 = arith.cmpf oge, %113, %114 : vector<4x256xf32>
    %cst_40 = arith.constant 1.000000e+00 : f32
    %cst_41 = arith.constant -1.000000e+00 : f32
    %116 = vector.broadcast %cst_40 : f32 to vector<4x256xf32>
    %117 = vector.broadcast %cst_41 : f32 to vector<4x256xf32>
    %118 = arith.select %115, %116, %117 : vector<4x256xi1>, vector<4x256xf32>
    %119 = math.absf %113 : vector<4x256xf32>
    %cst_42 = arith.constant 0.327591091 : f32
    %120 = vector.broadcast %cst_42 : f32 to vector<4x256xf32>
    %121 = arith.mulf %120, %119 : vector<4x256xf32>
    %cst_43 = arith.constant 1.000000e+00 : f32
    %122 = vector.broadcast %cst_43 : f32 to vector<4x256xf32>
    %123 = arith.addf %122, %121 : vector<4x256xf32>
    %cst_44 = arith.constant 1.000000e+00 : f32
    %124 = vector.broadcast %cst_44 : f32 to vector<4x256xf32>
    %125 = arith.divf %124, %123 : vector<4x256xf32>
    %cst_45 = arith.constant 1.06140542 : f32
    %126 = vector.broadcast %cst_45 : f32 to vector<4x256xf32>
    %127 = arith.mulf %126, %125 : vector<4x256xf32>
    %cst_46 = arith.constant -1.45315206 : f32
    %128 = vector.broadcast %cst_46 : f32 to vector<4x256xf32>
    %129 = arith.addf %127, %128 : vector<4x256xf32>
    %130 = arith.mulf %129, %125 : vector<4x256xf32>
    %cst_47 = arith.constant 1.42141378 : f32
    %131 = vector.broadcast %cst_47 : f32 to vector<4x256xf32>
    %132 = arith.addf %130, %131 : vector<4x256xf32>
    %133 = arith.mulf %132, %125 : vector<4x256xf32>
    %cst_48 = arith.constant -0.284496725 : f32
    %134 = vector.broadcast %cst_48 : f32 to vector<4x256xf32>
    %135 = arith.addf %133, %134 : vector<4x256xf32>
    %136 = arith.mulf %135, %125 : vector<4x256xf32>
    %cst_49 = arith.constant 0.254829586 : f32
    %137 = vector.broadcast %cst_49 : f32 to vector<4x256xf32>
    %138 = arith.addf %136, %137 : vector<4x256xf32>
    %139 = arith.mulf %138, %125 : vector<4x256xf32>
    %cst_50 = arith.constant 0.000000e+00 : f32
    %140 = vector.broadcast %cst_50 : f32 to vector<4x256xf32>
    %141 = arith.subf %140, %119 : vector<4x256xf32>
    %142 = arith.mulf %141, %119 : vector<4x256xf32>
    %143 = math.exp %142 : vector<4x256xf32>
    %144 = arith.mulf %139, %143 : vector<4x256xf32>
    %cst_51 = arith.constant 1.000000e+00 : f32
    %145 = vector.broadcast %cst_51 : f32 to vector<4x256xf32>
    %146 = arith.subf %145, %144 : vector<4x256xf32>
    %147 = arith.mulf %118, %146 : vector<4x256xf32>
    %cst_52 = arith.constant 1.000000e+00 : f32
    %148 = vector.broadcast %cst_52 : f32 to vector<4x256xf32>
    %149 = arith.addf %148, %147 : vector<4x256xf32>
    %150 = arith.mulf %111, %149 : vector<4x256xf32>
    %151 = arith.truncf %150 : vector<4x256xf32> to vector<4x256xbf16>
    %c0_53 = arith.constant 0 : index
    %c0_54 = arith.constant 0 : index
    %152 = vector.load %arg8[%c0_53, %c0_54] : memref<256x128xbf16, #tpu.memory_space<vmem>>, vector<256x128xbf16>
    %cst_55 = arith.constant dense<0.000000e+00> : vector<4x128xf32>
    %153 = tpu.matmul %151, %152, %cst_55 {dimension_numbers = #tpu.dot_dimension_numbers<[1], [0], [0], [1], [0, 0, 1, 1], [], []>} : vector<4x256xbf16>, vector<256x128xbf16>, vector<4x128xf32> -> vector<4x128xf32>
    %154 = vector.broadcast %9 : vector<1x128xf32> to vector<4x128xf32>
    %155 = arith.addf %153, %154 : vector<4x128xf32>
    %156 = arith.addf %103, %155 : vector<4x128xf32>
    %cst_56 = arith.constant dense<0.000000e+00> : vector<4xf32>
    %157 = vector.multi_reduction <add>, %156, %cst_56 [1] : vector<4x128xf32> to vector<4xf32>
    %158 = vector.shape_cast %157 : vector<4xf32> to vector<4x1xf32>
    %cst_57 = arith.constant 1.280000e+02 : f32
    %159 = vector.broadcast %cst_57 : f32 to vector<4x1xf32>
    %160 = arith.divf %158, %159 : vector<4x1xf32>
    %161 = arith.mulf %156, %156 : vector<4x128xf32>
    %cst_58 = arith.constant dense<0.000000e+00> : vector<4xf32>
    %162 = vector.multi_reduction <add>, %161, %cst_58 [1] : vector<4x128xf32> to vector<4xf32>
    %163 = vector.shape_cast %162 : vector<4xf32> to vector<4x1xf32>
    %cst_59 = arith.constant 1.280000e+02 : f32
    %164 = vector.broadcast %cst_59 : f32 to vector<4x1xf32>
    %165 = arith.divf %163, %164 : vector<4x1xf32>
    %166 = arith.mulf %160, %160 : vector<4x1xf32>
    %167 = arith.subf %165, %166 : vector<4x1xf32>
    %cst_60 = arith.constant 9.99999996E-13 : f32
    %168 = vector.broadcast %cst_60 : f32 to vector<4x1xf32>
    %169 = arith.addf %167, %168 : vector<4x1xf32>
    %170 = math.rsqrt %169 : vector<4x1xf32>
    %171 = vector.broadcast %160 : vector<4x1xf32> to vector<4x128xf32>
    %172 = arith.subf %156, %171 : vector<4x128xf32>
    %173 = vector.broadcast %170 : vector<4x1xf32> to vector<4x128xf32>
    %174 = arith.mulf %172, %173 : vector<4x128xf32>
    %175 = vector.broadcast %10 : vector<1x128xf32> to vector<4x128xf32>
    %176 = arith.mulf %174, %175 : vector<4x128xf32>
    %177 = vector.broadcast %11 : vector<1x128xf32> to vector<4x128xf32>
    %178 = arith.addf %176, %177 : vector<4x128xf32>
    %179 = arith.truncf %178 : vector<4x128xf32> to vector<4x128xbf16>
    %c0_61 = arith.constant 0 : index
    %c0_62 = arith.constant 0 : index
    %180 = vector.load %arg9[%c0_61, %c0_62] : memref<128x128xbf16, #tpu.memory_space<vmem>>, vector<128x128xbf16>
    %cst_63 = arith.constant dense<0.000000e+00> : vector<4x128xf32>
    %181 = tpu.matmul %179, %180, %cst_63 {dimension_numbers = #tpu.dot_dimension_numbers<[1], [0], [0], [1], [0, 0, 1, 1], [], []>} : vector<4x128xbf16>, vector<128x128xbf16>, vector<4x128xf32> -> vector<4x128xf32>
    %c0_64 = arith.constant 0 : index
    %c0_65 = arith.constant 0 : index
    %182 = vector.load %arg12[%c0_64, %c0_65] : memref<1x128xf32, #tpu.memory_space<vmem>>, vector<1x128xf32>
    %183 = vector.broadcast %182 : vector<1x128xf32> to vector<4x128xf32>
    %184 = arith.addf %181, %183 : vector<4x128xf32>
    %185 = vector.shape_cast %184 : vector<4x128xf32> to vector<4x1x128xf32>
    %c0_66 = arith.constant 0 : index
    %c0_67 = arith.constant 0 : index
    %c0_68 = arith.constant 0 : index
    %186 = vector.load %arg13[%c0_66, %c0_67, %c0_68] : memref<4x1x128xf32, #tpu.memory_space<vmem>>, vector<4x1x128xf32>
    tpu.vector_store %arg13[%c0_66, %c0_67, %c0_68], %185 {strides = array<i32>} : memref<4x1x128xf32, #tpu.memory_space<vmem>>, vector<4x1x128xf32>,
    return
  }
  func.func @transform_0(%arg0: i32) -> (i32, i32, i32) {
    %c0_i32 = arith.constant 0 : i32
    %c0_i32_0 = arith.constant 0 : i32
    %c0_i32_1 = arith.constant 0 : i32
    return %arg0, %c0_i32, %c0_i32_0 : i32, i32, i32
  }
  func.func @transform_1(%arg0: i32) -> (i32, i32, i32) {
    %c0_i32 = arith.constant 0 : i32
    %c0_i32_0 = arith.constant 0 : i32
    %c0_i32_1 = arith.constant 0 : i32
    return %arg0, %c0_i32, %c0_i32_0 : i32, i32, i32
  }
  func.func @transform_2(%arg0: i32) -> (i32, i32) {
    %c0_i32 = arith.constant 0 : i32
    %c0_i32_0 = arith.constant 0 : i32
    %c0_i32_1 = arith.constant 0 : i32
    return %c0_i32, %c0_i32_0 : i32, i32
  }
  func.func @transform_3(%arg0: i32) -> (i32, i32) {
    %c0_i32 = arith.constant 0 : i32
    %c0_i32_0 = arith.constant 0 : i32
    %c0_i32_1 = arith.constant 0 : i32
    return %c0_i32, %c0_i32_0 : i32, i32
  }
  func.func @transform_4(%arg0: i32) -> (i32, i32) {
    %c0_i32 = arith.constant 0 : i32
    %c0_i32_0 = arith.constant 0 : i32
    %c0_i32_1 = arith.constant 0 : i32
    return %c0_i32, %c0_i32_0 : i32, i32
  }
  func.func @transform_5(%arg0: i32) -> (i32, i32) {
    %c0_i32 = arith.constant 0 : i32
    %c0_i32_0 = arith.constant 0 : i32
    %c0_i32_1 = arith.constant 0 : i32
    return %c0_i32, %c0_i32_0 : i32, i32
  }
  func.func @transform_6(%arg0: i32) -> (i32, i32) {
    %c0_i32 = arith.constant 0 : i32
    %c0_i32_0 = arith.constant 0 : i32
    %c0_i32_1 = arith.constant 0 : i32
    return %c0_i32, %c0_i32_0 : i32, i32
  }
  func.func @transform_7(%arg0: i32) -> (i32, i32) {
    %c0_i32 = arith.constant 0 : i32
    %c0_i32_0 = arith.constant 0 : i32
    %c0_i32_1 = arith.constant 0 : i32
    return %c0_i32, %c0_i32_0 : i32, i32
  }
  func.func @transform_8(%arg0: i32) -> (i32, i32) {
    %c0_i32 = arith.constant 0 : i32
    %c0_i32_0 = arith.constant 0 : i32
    %c0_i32_1 = arith.constant 0 : i32
    return %c0_i32, %c0_i32_0 : i32, i32
  }
  func.func @transform_9(%arg0: i32) -> (i32, i32) {
    %c0_i32 = arith.constant 0 : i32
    %c0_i32_0 = arith.constant 0 : i32
    %c0_i32_1 = arith.constant 0 : i32
    return %c0_i32, %c0_i32_0 : i32, i32
  }
  func.func @transform_10(%arg0: i32) -> (i32, i32) {
    %c0_i32 = arith.constant 0 : i32
    %c0_i32_0 = arith.constant 0 : i32
    %c0_i32_1 = arith.constant 0 : i32
    return %c0_i32, %c0_i32_0 : i32, i32
  }
  func.func @transform_11(%arg0: i32) -> (i32, i32) {
    %c0_i32 = arith.constant 0 : i32
    %c0_i32_0 = arith.constant 0 : i32
    %c0_i32_1 = arith.constant 0 : i32
    return %c0_i32, %c0_i32_0 : i32, i32
  }
  func.func @transform_12(%arg0: i32) -> (i32, i32, i32) {
    %c0_i32 = arith.constant 0 : i32
    %c0_i32_0 = arith.constant 0 : i32
    %c0_i32_1 = arith.constant 0 : i32
    return %arg0, %c0_i32, %c0_i32_0 : i32, i32, i32
  }
}

</mosaic_0001>

<llo_original>
// kernel: tpu_custom_call.1
$region0: #{tpu_custom_call.1}
  #allocation0 [shape = 'u32[]', space=smem, size = 0x4, offset = 0x4, fixed_abs, tag = 'smem constant byte address 0x4 - core index']
  #allocation1 [shape = 'u32[144,128]{1,0:T(1,128)}', space=vmem, size = 0x12000, scoped, tag = 'internal scratch']
  %s0 = inlined_call_operand.hbm [shape: bf16[4,8,128], index: 0, kind: input, shape index: {}]
  %s1 = inlined_call_operand.hbm [shape: f32[4,1,8], index: 1, kind: input, shape index: {}]
  %s2 = inlined_call_operand.hbm [shape: bf16[128,128], index: 2, kind: input, shape index: {}]
  %s3 = inlined_call_operand.hbm [shape: bf16[128,128], index: 3, kind: input, shape index: {}]
  %s4 = inlined_call_operand.hbm [shape: bf16[128,128], index: 4, kind: input, shape index: {}]
  %s5 = inlined_call_operand.hbm [shape: bf16[128,128], index: 5, kind: input, shape index: {}]
  %s6 = inlined_call_operand.hbm [shape: bf16[128,256], index: 6, kind: input, shape index: {}]
  %s7 = inlined_call_operand.hbm [shape: bf16[256,128], index: 7, kind: input, shape index: {}]
  %s8 = inlined_call_operand.hbm [shape: bf16[128,128], index: 8, kind: input, shape index: {}]
  %s9 = inlined_call_operand.vmem [shape: f32[11,128], index: 9, kind: input, shape index: {}]
  %s10 = inlined_call_operand.vmem [shape: f32[1,256], index: 10, kind: input, shape index: {}]
  %s11 = inlined_call_operand.vmem [shape: f32[1,128], index: 11, kind: input, shape index: {}]
  %s12 = inlined_call_operand.hbm [shape: f32[4,1,128], index: 12, kind: output, shape index: {}]
  %s13 = sld [smem:[#allocation0]]
  $region94: #{tpu_custom_call.1} parent=0
    _
  %s15 = ssub.s32 1, %s13
  %s16 = scalar_select 0, %s15, %s13
  $region1: #{tpu_custom_call.1} parent=0
    #allocation2 [shape = 'u8[8192]{0}', space=vmem, size = 0x2000, scoped, tag = 'input window, operand 0, single buffered']
    #allocation3 [shape = 's32[1]{0}', space=sflag, size = 0x4, scoped, tag = 'scoped memory for tpu_custom_call.1']
    #allocation4 [shape = 's32[1]{0}', space=sflag, size = 0x4, scoped, tag = 'scoped memory for tpu_custom_call.1']
    #allocation5 [shape = 'u8[2048]{0}', space=vmem, size = 0x800, scoped, tag = 'input window, operand 1, single buffered']
    #allocation6 [shape = 's32[1]{0}', space=sflag, size = 0x4, scoped, tag = 'scoped memory for tpu_custom_call.1']
    #allocation7 [shape = 'u8[32768]{0}', space=vmem, size = 0x8000, scoped, tag = 'input window, operand 2, single buffered']
    #allocation8 [shape = 'u8[32768]{0}', space=vmem, size = 0x8000, scoped, tag = 'input window, operand 3, single buffered']
    #allocation9 [shape = 's32[1]{0}', space=sflag, size = 0x4, scoped, tag = 'scoped memory for tpu_custom_call.1']
    #allocation10 [shape = 'u8[32768]{0}', space=vmem, size = 0x8000, scoped, tag = 'input window, operand 4, single buffered']
    #allocation11 [shape = 'u8[32768]{0}', space=vmem, size = 0x8000, scoped, tag = 'input window, operand 5, single buffered']
    #allocation12 [shape = 's32[1]{0}', space=sflag, size = 0x4, scoped, tag = 'scoped memory for tpu_custom_call.1']
    #allocation13 [shape = 'u8[65536]{0}', space=vmem, size = 0x10000, scoped, tag = 'input window, operand 6, single buffered']
    #allocation14 [shape = 'u8[65536]{0}', space=vmem, size = 0x10000, scoped, tag = 'input window, operand 7, single buffered']
    #allocation15 [shape = 's32[1]{0}', space=sflag, size = 0x4, scoped, tag = 'scoped memory for tpu_custom_call.1']
    #allocation16 [shape = 'u8[32768]{0}', space=vmem, size = 0x8000, scoped, tag = 'input window, operand 8, single buffered']
    #allocation17 [shape = 'u8[2048]{0}', space=vmem, size = 0x800, scoped, tag = 'output window, operand 0, single buffered']
    %17 = vsyncpa [#allocation3], 0
    %18 = vsyncpa [#allocation6], 0
    %19 = vsyncpa [#allocation9], 0
    %20 = vsyncpa [#allocation12], 0
    %21 = vsyncpa [#allocation15], 0
    %22 = vsyncpa [#allocation4], 0
    // Predicated region
    $region2: #{tpu_custom_call.1} parent=1 // pred_check
      _
    $region3: #{tpu_custom_call.1} parent=1 // pred_check_branch
      %24 = sbr.rel (0) target = $region5
    $region4: #{tpu_custom_call.1} parent=1 // pred_region
      %s26 = ssub.s32 256, 256
      %27 = vsyncadd [#allocation3], %s26
      %s28 = sshll.u32 [#allocation2], 4
      %s29 = int_to_ptr.vmem [resolvable:$true] %s28
      %34 = dma.hbm_to_vmem [thread:$0]  %s0, 256, %s29, [#allocation3], 64, 64, 4
    $region5: #{tpu_custom_call.1} parent=1 // pred_fallthru
      _
    // Predicated region
    $region6: #{tpu_custom_call.1} parent=1 // pred_check
      _
    $region7: #{tpu_custom_call.1} parent=1 // pred_check_branch
      %36 = sbr.rel (0) target = $region9
    $region8: #{tpu_custom_call.1} parent=1 // pred_region
      %s38 = ssub.s32 64, 64
      %39 = vsyncadd [#allocation6], %s38
      %s40 = sshll.u32 [#allocation5], 4
      %s41 = int_to_ptr.vmem [resolvable:$true] %s40
      %46 = dma.hbm_to_vmem [thread:$0]  %s1, 64, %s41, [#allocation6], 16, 16, 1
    $region9: #{tpu_custom_call.1} parent=1 // pred_fallthru
      _
    // Predicated region
    $region10: #{tpu_custom_call.1} parent=1 // pred_check
      _
    $region11: #{tpu_custom_call.1} parent=1 // pred_check_branch
      %48 = sbr.rel (0) target = $region13
    $region12: #{tpu_custom_call.1} parent=1 // pred_region
      %s50 = ssub.s32 1024, 1024
      %51 = vsyncadd [#allocation6], %s50
      %s52 = sshll.u32 [#allocation7], 4
      %s53 = int_to_ptr.vmem [resolvable:$true] %s52
      %58 = dma.hbm_to_vmem [thread:$0]  %s2, 1024, %s53, [#allocation6], 64, 64, 4
    $region13: #{tpu_custom_call.1} parent=1 // pred_fallthru
      _
    // Predicated region
    $region14: #{tpu_custom_call.1} parent=1 // pred_check
      _
    $region15: #{tpu_custom_call.1} parent=1 // pred_check_branch
      %60 = sbr.rel (0) target = $region17
    $region16: #{tpu_custom_call.1} parent=1 // pred_region
      %s62 = ssub.s32 1024, 1024
      %63 = vsyncadd [#allocation9], %s62
      %s64 = sshll.u32 [#allocation8], 4
      %s65 = int_to_ptr.vmem [resolvable:$true] %s64
      %70 = dma.hbm_to_vmem [thread:$0]  %s3, 1024, %s65, [#allocation9], 64, 64, 4
    $region17: #{tpu_custom_call.1} parent=1 // pred_fallthru
      _
    // Predicated region
    $region18: #{tpu_custom_call.1} parent=1 // pred_check
      _
    $region19: #{tpu_custom_call.1} parent=1 // pred_check_branch
      %72 = sbr.rel (0) target = $region21
    $region20: #{tpu_custom_call.1} parent=1 // pred_region
      %s74 = ssub.s32 1024, 1024
      %75 = vsyncadd [#allocation9], %s74
      %s76 = sshll.u32 [#allocation10], 4
      %s77 = int_to_ptr.vmem [resolvable:$true] %s76
      %82 = dma.hbm_to_vmem [thread:$0]  %s4, 1024, %s77, [#allocation9], 64, 64, 4
    $region21: #{tpu_custom_call.1} parent=1 // pred_fallthru
      _
    // Predicated region
    $region22: #{tpu_custom_call.1} parent=1 // pred_check
      _
    $region23: #{tpu_custom_call.1} parent=1 // pred_check_branch
      %84 = sbr.rel (0) target = $region25
    $region24: #{tpu_custom_call.1} parent=1 // pred_region
      %s86 = ssub.s32 1024, 1024
      %87 = vsyncadd [#allocation12], %s86
      %s88 = sshll.u32 [#allocation11], 4
      %s89 = int_to_ptr.vmem [resolvable:$true] %s88
      %94 = dma.hbm_to_vmem [thread:$0]  %s5, 1024, %s89, [#allocation12], 64, 64, 4
    $region25: #{tpu_custom_call.1} parent=1 // pred_fallthru
      _
    // Predicated region
    $region26: #{tpu_custom_call.1} parent=1 // pred_check
      _
    $region27: #{tpu_custom_call.1} parent=1 // pred_check_branch
      %96 = sbr.rel (0) target = $region29
    $region28: #{tpu_custom_call.1} parent=1 // pred_region
      %s98 = ssub.s32 2048, 2048
      %99 = vsyncadd [#allocation12], %s98
      %s100 = sshll.u32 [#allocation13], 4
      %s101 = int_to_ptr.vmem [resolvable:$true] %s100
      %106 = dma.hbm_to_vmem [thread:$0]  %s6, 2048, %s101, [#allocation12], 128, 128, 8
    $region29: #{tpu_custom_call.1} parent=1 // pred_fallthru
      _
    // Predicated region
    $region30: #{tpu_custom_call.1} parent=1 // pred_check
      _
    $region31: #{tpu_custom_call.1} parent=1 // pred_check_branch
      %108 = sbr.rel (0) target = $region33
    $region32: #{tpu_custom_call.1} parent=1 // pred_region
      %s110 = ssub.s32 2048, 2048
      %111 = vsyncadd [#allocation15], %s110
      %s112 = sshll.u32 [#allocation14], 4
      %s113 = int_to_ptr.vmem [resolvable:$true] %s112
      %118 = dma.hbm_to_vmem [thread:$0]  %s7, 2048, %s113, [#allocation15], 64, 64, 4
    $region33: #{tpu_custom_call.1} parent=1 // pred_fallthru
      _
    // Predicated region
    $region34: #{tpu_custom_call.1} parent=1 // pred_check
      _
    $region35: #{tpu_custom_call.1} parent=1 // pred_check_branch
      %120 = sbr.rel (0) target = $region37
    $region36: #{tpu_custom_call.1} parent=1 // pred_region
      %s122 = ssub.s32 1024, 1024
      %123 = vsyncadd [#allocation15], %s122
      %s124 = sshll.u32 [#allocation16], 4
      %s125 = int_to_ptr.vmem [resolvable:$true] %s124
      %130 = dma.hbm_to_vmem [thread:$0]  %s8, 1024, %s125, [#allocation15], 64, 64, 4
    $region37: #{tpu_custom_call.1} parent=1 // pred_fallthru
      _
    // Predicated region
    $region38: #{tpu_custom_call.1} parent=1 // pred_check
      _
    $region39: #{tpu_custom_call.1} parent=1 // pred_check_branch
      %132 = sbr.rel (0) target = $region41
    $region40: #{tpu_custom_call.1} parent=1 // pred_region
      _
    $region41: #{tpu_custom_call.1} parent=1 // pred_fallthru
      _
    // Predicated region
    $region42: #{tpu_custom_call.1} parent=1 // pred_check
      _
    $region43: #{tpu_custom_call.1} parent=1 // pred_check_branch
      %134 = sbr.rel (0) target = $region45
    $region44: #{tpu_custom_call.1} parent=1 // pred_region
      _
    $region45: #{tpu_custom_call.1} parent=1 // pred_fallthru
      _
    // Predicated region
    $region46: #{tpu_custom_call.1} parent=1 // pred_check
      _
    $region47: #{tpu_custom_call.1} parent=1 // pred_check_branch
      %136 = sbr.rel (0) target = $region49
    $region48: #{tpu_custom_call.1} parent=1 // pred_region
      _
    $region49: #{tpu_custom_call.1} parent=1 // pred_fallthru
      _
    // Predicated region
    $region50: #{tpu_custom_call.1} parent=1 // pred_check
      _
    $region51: #{tpu_custom_call.1} parent=1 // pred_check_branch
      %138 = sbr.rel (0) target = $region53
    $region52: #{tpu_custom_call.1} parent=1 // pred_region
      %139 = dma.done [#allocation3], 256
    $region53: #{tpu_custom_call.1} parent=1 // pred_fallthru
      _
    // Predicated region
    $region54: #{tpu_custom_call.1} parent=1 // pred_check
      _
    $region55: #{tpu_custom_call.1} parent=1 // pred_check_branch
      %141 = sbr.rel (0) target = $region57
    $region56: #{tpu_custom_call.1} parent=1 // pred_region
      %142 = dma.done [#allocation6], 64
    $region57: #{tpu_custom_call.1} parent=1 // pred_fallthru
      _
    // Predicated region
    $region58: #{tpu_custom_call.1} parent=1 // pred_check
      _
    $region59: #{tpu_custom_call.1} parent=1 // pred_check_branch
      %144 = sbr.rel (0) target = $region61
    $region60: #{tpu_custom_call.1} parent=1 // pred_region
      %145 = dma.done [#allocation6], 1024
    $region61: #{tpu_custom_call.1} parent=1 // pred_fallthru
      _
    // Predicated region
    $region62: #{tpu_custom_call.1} parent=1 // pred_check
      _
    $region63: #{tpu_custom_call.1} parent=1 // pred_check_branch
      %147 = sbr.rel (0) target = $region65
    $region64: #{tpu_custom_call.1} parent=1 // pred_region
      %148 = dma.done [#allocation9], 1024
    $region65: #{tpu_custom_call.1} parent=1 // pred_fallthru
      _
    // Predicated region
    $region66: #{tpu_custom_call.1} parent=1 // pred_check
      _
    $region67: #{tpu_custom_call.1} parent=1 // pred_check_branch
      %150 = sbr.rel (0) target = $region69
    $region68: #{tpu_custom_call.1} parent=1 // pred_region
      %151 = dma.done [#allocation9], 1024
    $region69: #{tpu_custom_call.1} parent=1 // pred_fallthru
      _
    // Predicated region
    $region70: #{tpu_custom_call.1} parent=1 // pred_check
      _
    $region71: #{tpu_custom_call.1} parent=1 // pred_check_branch
      %153 = sbr.rel (0) target = $region73
    $region72: #{tpu_custom_call.1} parent=1 // pred_region
      %154 = dma.done [#allocation12], 1024
    $region73: #{tpu_custom_call.1} parent=1 // pred_fallthru
      _
    // Predicated region
    $region74: #{tpu_custom_call.1} parent=1 // pred_check
      _
    $region75: #{tpu_custom_call.1} parent=1 // pred_check_branch
      %156 = sbr.rel (0) target = $region77
    $region76: #{tpu_custom_call.1} parent=1 // pred_region
      %157 = dma.done [#allocation12], 2048
    $region77: #{tpu_custom_call.1} parent=1 // pred_fallthru
      _
    // Predicated region
    $region78: #{tpu_custom_call.1} parent=1 // pred_check
      _
    $region79: #{tpu_custom_call.1} parent=1 // pred_check_branch
      %159 = sbr.rel (0) target = $region81
    $region80: #{tpu_custom_call.1} parent=1 // pred_region
      %160 = dma.done [#allocation15], 2048
    $region81: #{tpu_custom_call.1} parent=1 // pred_fallthru
      _
    // Predicated region
    $region82: #{tpu_custom_call.1} parent=1 // pred_check
      _
    $region83: #{tpu_custom_call.1} parent=1 // pred_check_branch
      %162 = sbr.rel (0) target = $region85
    $region84: #{tpu_custom_call.1} parent=1 // pred_region
      %163 = dma.done [#allocation15], 1024
    $region85: #{tpu_custom_call.1} parent=1 // pred_fallthru
      _
    %v165 = vld [vmem:[%s9] sm:$0xff]
    %v166 = vld [vmem:[%s9 + $0x8] sm:$0x7]
    %v167 = vld [vmem:[#allocation2] sm:$0xf]
    %v168 = vld [vmem:[#allocation2 + $0x4] sm:$0xf]
    %v169 = vld [vmem:[#allocation2 + $0x8] sm:$0xf]
    %v170 = vld [vmem:[#allocation2 + $0xc] sm:$0xf]
    %v171 = vunpack.c.l.bf16 %v167
    %v172 = vunpack.c.l.bf16 %v168
    %v173 = vunpack.c.l.bf16 %v169
    %v174 = vunpack.c.l.bf16 %v170
    %175 = vadd.xlane.f32.xlu0 %v171
    %v176 = vpop.xlane.xlu0 %175
    %177 = vadd.xlane.f32.xlu0 %v172
    %v178 = vpop.xlane.xlu0 %177
    %179 = vadd.xlane.f32.xlu0 %v173
    %v180 = vpop.xlane.xlu0 %179
    %181 = vadd.xlane.f32.xlu0 %v174
    %v182 = vpop.xlane.xlu0 %181
    %v183 = vrcp.pop 128.0
    %v184 = vmul.f32 %v176, %v183
    %v185 = vmul.f32 %v178, %v183
    %v186 = vmul.f32 %v180, %v183
    %v187 = vmul.f32 %v182, %v183
    %v188 = vmul.f32 %v171, %v171
    %v189 = vmul.f32 %v172, %v172
    %v190 = vmul.f32 %v173, %v173
    %v191 = vmul.f32 %v174, %v174
    %192 = vadd.xlane.f32.xlu0 %v188
    %v193 = vpop.xlane.xlu0 %192
    %194 = vadd.xlane.f32.xlu0 %v189
    %v195 = vpop.xlane.xlu0 %194
    %196 = vadd.xlane.f32.xlu0 %v190
    %v197 = vpop.xlane.xlu0 %196
    %198 = vadd.xlane.f32.xlu0 %v191
    %v199 = vpop.xlane.xlu0 %198
    %v200 = vmul.f32 %v193, %v183
    %v201 = vmul.f32 %v195, %v183
    %v202 = vmul.f32 %v197, %v183
    %v203 = vmul.f32 %v199, %v183
    %v204 = vmul.f32 %v184, %v184
    %v205 = vmul.f32 %v185, %v185
    %v206 = vmul.f32 %v186, %v186
    %v207 = vmul.f32 %v187, %v187
    %v208 = vsub.f32 %v200, %v204
    %v209 = vsub.f32 %v201, %v205
    %v210 = vsub.f32 %v202, %v206
    %v211 = vsub.f32 %v203, %v207
    %v212 = vadd.f32 %v208, 1e-12
    %v213 = vadd.f32 %v209, 1e-12
    %v214 = vadd.f32 %v210, 1e-12
    %v215 = vadd.f32 %v211, 1e-12
    %v216 = vrsqrt.pop %v212
    %v217 = vrsqrt.pop %v213
    %v218 = vrsqrt.pop %v214
    %v219 = vrsqrt.pop %v215
    %v220 = vsub.f32 %v171, %v184
    %v221 = vsub.f32 %v172, %v185
    %v222 = vsub.f32 %v173, %v186
    %v223 = vsub.f32 %v174, %v187
    %v224 = vmul.f32 %v220, %v216
    %v225 = vmul.f32 %v221, %v217
    %v226 = vmul.f32 %v222, %v218
    %v227 = vmul.f32 %v223, %v219
    %v228 = vlaneseq
    %v229 = vshrl.u32 %v228, 7
    %v230 = vsub.s32 0, %v229
    %v231 = vrot.slane %v165, %v230
    %v232 = vmul.f32 %v224, %v231
    %v233 = vmul.f32 %v225, %v231
    %v234 = vmul.f32 %v226, %v231
    %v235 = vmul.f32 %v227, %v231
    %v236 = vlaneseq
    %v237 = vshrl.u32 %v236, 7
    %v238 = vsub.s32 1, %v237
    %v239 = vrot.slane %v165, %v238
    %v240 = vadd.f32 %v232, %v239
    %v241 = vadd.f32 %v233, %v239
    %v242 = vadd.f32 %v234, %v239
    %v243 = vadd.f32 %v235, %v239
    %v244 = vpack.c.bf16 %v241, %v240
    %v245 = vpack.c.bf16 %v243, %v242
    %v246 = vld [vmem:[#allocation8] sm:$0xf]
    %v247 = vld [vmem:[#allocation8 + $0x4] sm:$0xf]
    %v248 = vld [vmem:[#allocation8 + $0x8] sm:$0xf]
    %v249 = vld [vmem:[#allocation8 + $0xc] sm:$0xf]
    %v250 = vld [vmem:[#allocation8 + $0x10] sm:$0xf]
    %v251 = vld [vmem:[#allocation8 + $0x14] sm:$0xf]
    %v252 = vld [vmem:[#allocation8 + $0x18] sm:$0xf]
    %v253 = vld [vmem:[#allocation8 + $0x1c] sm:$0xf]
    %v254 = vld [vmem:[#allocation8 + $0x20] sm:$0xf]
    %v255 = vld [vmem:[#allocation8 + $0x24] sm:$0xf]
    %v256 = vld [vmem:[#allocation8 + $0x28] sm:$0xf]
    %v257 = vld [vmem:[#allocation8 + $0x2c] sm:$0xf]
    %v258 = vld [vmem:[#allocation8 + $0x30] sm:$0xf]
    %v259 = vld [vmem:[#allocation8 + $0x34] sm:$0xf]
    %v260 = vld [vmem:[#allocation8 + $0x38] sm:$0xf]
    %v261 = vld [vmem:[#allocation8 + $0x3c] sm:$0xf]
    %v262 = vlaneseq
    %v263 = vshrl.u32 %v262, 7
    %v264 = vsub.s32 3, %v263
    %v265 = vrot.slane %v165, %v264
    %v282 = vunpack.c.l.b16 %v246
    %v283 = vunpack.c.l.b16 %v247
    %v284 = vunpack.c.l.b16 %v248
    %v285 = vunpack.c.l.b16 %v249
    %v286 = vunpack.c.l.b16 %v250
    %v287 = vunpack.c.l.b16 %v251
    %v288 = vunpack.c.l.b16 %v252
    %v289 = vunpack.c.l.b16 %v253
    %v290 = vunpack.c.l.b16 %v254
    %v291 = vunpack.c.l.b16 %v255
    %v292 = vunpack.c.l.b16 %v256
    %v293 = vunpack.c.l.b16 %v257
    %v294 = vunpack.c.l.b16 %v258
    %v295 = vunpack.c.l.b16 %v259
    %v296 = vunpack.c.l.b16 %v260
    %v297 = vunpack.c.l.b16 %v261
    %v298 = vpack.c.b16 %v283, %v282
    %v299 = vpack.c.b16 %v285, %v284
    %v300 = vpack.c.b16 %v287, %v286
    %v301 = vpack.c.b16 %v289, %v288
    %v302 = vpack.c.b16 %v291, %v290
    %v303 = vpack.c.b16 %v293, %v292
    %v304 = vpack.c.b16 %v295, %v294
    %v305 = vpack.c.b16 %v297, %v296
    %314 = vmatprep.subr.bf16.mxu0 0
    %315 = vmatpush1.bf16.msra.mxu0 %v305
    %316 = vmatprep.subr.bf16.mxu0 0
    %317 = vmatpush1.bf16.msra.mxu0 %v304
    %318 = vmatprep.subr.bf16.mxu0 0
    %319 = vmatpush1.bf16.msra.mxu0 %v303
    %320 = vmatprep.subr.bf16.mxu0 0
    %321 = vmatpush1.bf16.msra.mxu0 %v302
    %322 = vmatprep.subr.bf16.mxu0 0
    %323 = vmatpush1.bf16.msra.mxu0 %v301
    %324 = vmatprep.subr.bf16.mxu0 0
    %325 = vmatpush1.bf16.msra.mxu0 %v300
    %326 = vmatprep.subr.bf16.mxu0 0
    %327 = vmatpush1.bf16.msra.mxu0 %v299
    %328 = vmatprep.subr.bf16.mxu0 0
    %329 = vmatpush1.bf16.msra.mxu0 %v298
    %330 = vmatprep.subr.bf16.mxu0 0
    %331 = vmatpush2.bf16.msra.mxu0 0
    %332 = vmatprep.subr.bf16.mxu0 0
    %333 = vmatpush2.bf16.msra.mxu0 0
    %334 = vmatprep.subr.bf16.mxu0 0
    %335 = vmatpush2.bf16.msra.mxu0 0
    %336 = vmatprep.subr.bf16.mxu0 0
    %337 = vmatpush2.bf16.msra.mxu0 0
    %338 = vmatprep.subr.bf16.mxu0 0
    %339 = vmatpush2.bf16.msra.mxu0 0
    %340 = vmatprep.subr.bf16.mxu0 0
    %341 = vmatpush2.bf16.msra.mxu0 0
    %342 = vmatprep.subr.bf16.mxu0 0
    %343 = vmatpush2.bf16.msra.mxu0 0
    %344 = vmatprep.subr.bf16.mxu0 0
    %345 = vmatpush2.bf16.msra.mxu0 0
    %346 = vmatprep.mubr.bf16.mxu0 0
    %347 = vmatmul.mubr.bf16.gmra.mxu0 %v244
    %v348 = vpop.f32.mrf.mxu0
    %v349 = vadd.f32 %v265, %v348
    %v350 = vpop.f32.mrf.mxu0
    %v351 = vpop.f32.mrf.mxu0
    %v352 = vadd.f32 %v265, %v351
    %v353 = vpop.f32.mrf.mxu0
    %354 = vmatprep.mubr.bf16.mxu0 0
    %355 = vmatmul.mubr.bf16.gmra.mxu0 %v245
    %v356 = vpop.f32.mrf.mxu0
    %v357 = vadd.f32 %v265, %v356
    %v358 = vpop.f32.mrf.mxu0
    %v359 = vpop.f32.mrf.mxu0
    %v360 = vadd.f32 %v265, %v359
    %v361 = vpop.f32.mrf.mxu0
    %362 = vdwg.mxu0
    %v363 = vld [vmem:[#allocation10] sm:$0xf]
    %v364 = vld [vmem:[#allocation10 + $0x4] sm:$0xf]
    %v365 = vld [vmem:[#allocation10 + $0x8] sm:$0xf]
    %v366 = vld [vmem:[#allocation10 + $0xc] sm:$0xf]
    %v367 = vld [vmem:[#allocation10 + $0x10] sm:$0xf]
    %v368 = vld [vmem:[#allocation10 + $0x14] sm:$0xf]
    %v369 = vld [vmem:[#allocation10 + $0x18] sm:$0xf]
    %v370 = vld [vmem:[#allocation10 + $0x1c] sm:$0xf]
    %v371 = vld [vmem:[#allocation10 + $0x20] sm:$0xf]
    %v372 = vld [vmem:[#allocation10 + $0x24] sm:$0xf]
    %v373 = vld [vmem:[#allocation10 + $0x28] sm:$0xf]
    %v374 = vld [vmem:[#allocation10 + $0x2c] sm:$0xf]
    %v375 = vld [vmem:[#allocation10 + $0x30] sm:$0xf]
    %v376 = vld [vmem:[#allocation10 + $0x34] sm:$0xf]
    %v377 = vld [vmem:[#allocation10 + $0x38] sm:$0xf]
    %v378 = vld [vmem:[#allocation10 + $0x3c] sm:$0xf]
    %v379 = vlaneseq
    %v380 = vshrl.u32 %v379, 7
    %v381 = vsub.s32 4, %v380
    %v382 = vrot.slane %v165, %v381
    %v399 = vunpack.c.l.b16 %v363
    %v400 = vunpack.c.l.b16 %v364
    %v401 = vunpack.c.l.b16 %v365
    %v402 = vunpack.c.l.b16 %v366
    %v403 = vunpack.c.l.b16 %v367
    %v404 = vunpack.c.l.b16 %v368
    %v405 = vunpack.c.l.b16 %v369
    %v406 = vunpack.c.l.b16 %v370
    %v407 = vunpack.c.l.b16 %v371
    %v408 = vunpack.c.l.b16 %v372
    %v409 = vunpack.c.l.b16 %v373
    %v410 = vunpack.c.l.b16 %v374
    %v411 = vunpack.c.l.b16 %v375
    %v412 = vunpack.c.l.b16 %v376
    %v413 = vunpack.c.l.b16 %v377
    %v414 = vunpack.c.l.b16 %v378
    %v415 = vpack.c.b16 %v400, %v399
    %v416 = vpack.c.b16 %v402, %v401
    %v417 = vpack.c.b16 %v404, %v403
    %v418 = vpack.c.b16 %v406, %v405
    %v419 = vpack.c.b16 %v408, %v407
    %v420 = vpack.c.b16 %v410, %v409
    %v421 = vpack.c.b16 %v412, %v411
    %v422 = vpack.c.b16 %v414, %v413
    %431 = vmatprep.subr.bf16.mxu0 0
    %432 = vmatpush1.bf16.msra.mxu0 %v422
    %433 = vmatprep.subr.bf16.mxu0 0
    %434 = vmatpush1.bf16.msra.mxu0 %v421
    %435 = vmatprep.subr.bf16.mxu0 0
    %436 = vmatpush1.bf16.msra.mxu0 %v420
    %437 = vmatprep.subr.bf16.mxu0 0
    %438 = vmatpush1.bf16.msra.mxu0 %v419
    %439 = vmatprep.subr.bf16.mxu0 0
    %440 = vmatpush1.bf16.msra.mxu0 %v418
    %441 = vmatprep.subr.bf16.mxu0 0
    %442 = vmatpush1.bf16.msra.mxu0 %v417
    %443 = vmatprep.subr.bf16.mxu0 0
    %444 = vmatpush1.bf16.msra.mxu0 %v416
    %445 = vmatprep.subr.bf16.mxu0 0
    %446 = vmatpush1.bf16.msra.mxu0 %v415
    %447 = vmatprep.subr.bf16.mxu0 0
    %448 = vmatpush2.bf16.msra.mxu0 0
    %449 = vmatprep.subr.bf16.mxu0 0
    %450 = vmatpush2.bf16.msra.mxu0 0
    %451 = vmatprep.subr.bf16.mxu0 0
    %452 = vmatpush2.bf16.msra.mxu0 0
    %453 = vmatprep.subr.bf16.mxu0 0
    %454 = vmatpush2.bf16.msra.mxu0 0
    %455 = vmatprep.subr.bf16.mxu0 0
    %456 = vmatpush2.bf16.msra.mxu0 0
    %457 = vmatprep.subr.bf16.mxu0 0
    %458 = vmatpush2.bf16.msra.mxu0 0
    %459 = vmatprep.subr.bf16.mxu0 0
    %460 = vmatpush2.bf16.msra.mxu0 0
    %461 = vmatprep.subr.bf16.mxu0 0
    %462 = vmatpush2.bf16.msra.mxu0 0
    %463 = vmatprep.mubr.bf16.mxu0 0
    %464 = vmatmul.mubr.bf16.gmra.mxu0 %v244
    %v465 = vpop.f32.mrf.mxu0
    %v466 = vadd.f32 %v382, %v465
    %v467 = vpop.f32.mrf.mxu0
    %v468 = vpop.f32.mrf.mxu0
    %v469 = vadd.f32 %v382, %v468
    %v470 = vpop.f32.mrf.mxu0
    %471 = vmatprep.mubr.bf16.mxu0 0
    %472 = vmatmul.mubr.bf16.gmra.mxu0 %v245
    %v473 = vpop.f32.mrf.mxu0
    %v474 = vadd.f32 %v382, %v473
    %v475 = vpop.f32.mrf.mxu0
    %v476 = vpop.f32.mrf.mxu0
    %v477 = vadd.f32 %v382, %v476
    %v478 = vpop.f32.mrf.mxu0
    %479 = vdwg.mxu0
    %v480 = vpack.c.bf16 %v349, %v349
    %v481 = vpack.c.bf16 %v352, %v352
    %v482 = vpack.c.bf16 %v357, %v357
    %v483 = vpack.c.bf16 %v360, %v360
    %v484 = vpack.c.bf16 %v466, %v466
    %v485 = vpack.c.bf16 %v469, %v469
    %v486 = vpack.c.bf16 %v474, %v474
    %v487 = vpack.c.bf16 %v477, %v477
    %v488 = vpack.c.bf16 %v240, %v240
    %v489 = vpack.c.bf16 %v241, %v241
    %v490 = vpack.c.bf16 %v242, %v242
    %v491 = vpack.c.bf16 %v243, %v243
    %v492 = vld [vmem:[#allocation7] sm:$0xf]
    %v493 = vld [vmem:[#allocation7 + $0x4] sm:$0xf]
    %v494 = vld [vmem:[#allocation7 + $0x8] sm:$0xf]
    %v495 = vld [vmem:[#allocation7 + $0xc] sm:$0xf]
    %v496 = vld [vmem:[#allocation7 + $0x10] sm:$0xf]
    %v497 = vld [vmem:[#allocation7 + $0x14] sm:$0xf]
    %v498 = vld [vmem:[#allocation7 + $0x18] sm:$0xf]
    %v499 = vld [vmem:[#allocation7 + $0x1c] sm:$0xf]
    %v500 = vld [vmem:[#allocation7 + $0x20] sm:$0xf]
    %v501 = vld [vmem:[#allocation7 + $0x24] sm:$0xf]
    %v502 = vld [vmem:[#allocation7 + $0x28] sm:$0xf]
    %v503 = vld [vmem:[#allocation7 + $0x2c] sm:$0xf]
    %v504 = vld [vmem:[#allocation7 + $0x30] sm:$0xf]
    %v505 = vld [vmem:[#allocation7 + $0x34] sm:$0xf]
    %v506 = vld [vmem:[#allocation7 + $0x38] sm:$0xf]
    %v507 = vld [vmem:[#allocation7 + $0x3c] sm:$0xf]
    %v508 = vlaneseq
    %v509 = vshrl.u32 %v508, 7
    %v510 = vsub.s32 2, %v509
    %v511 = vrot.slane %v165, %v510
    %v516 = vunpack.c.l.b16 %v488
    %v517 = vunpack.c.l.b16 %v489
    %v518 = vunpack.c.l.b16 %v490
    %v519 = vunpack.c.l.b16 %v491
    %v520 = vrot.slane %v517, 7
    %vm521 = vcmask 1041409
    %v522 = vsel %vm521, %v520, %v516
    %v523 = vrot.slane %v518, 6
    %vm524 = vcmask 1042434
    %v525 = vsel %vm524, %v523, %v522
    %v526 = vrot.slane %v519, 5
    %vm527 = vcmask 1043459
    %v528 = vsel %vm527, %v526, %v525
    %v529 = vpack.c.b16 %v528, %v528
    %v547 = vunpack.c.l.b16 %v492
    %v548 = vunpack.c.l.b16 %v493
    %v549 = vunpack.c.l.b16 %v494
    %v550 = vunpack.c.l.b16 %v495
    %v551 = vunpack.c.l.b16 %v496
    %v552 = vunpack.c.l.b16 %v497
    %v553 = vunpack.c.l.b16 %v498
    %v554 = vunpack.c.l.b16 %v499
    %v555 = vunpack.c.l.b16 %v500
    %v556 = vunpack.c.l.b16 %v501
    %v557 = vunpack.c.l.b16 %v502
    %v558 = vunpack.c.l.b16 %v503
    %v559 = vunpack.c.l.b16 %v504
    %v560 = vunpack.c.l.b16 %v505
    %v561 = vunpack.c.l.b16 %v506
    %v562 = vunpack.c.l.b16 %v507
    %v563 = vpack.c.b16 %v548, %v547
    %v564 = vpack.c.b16 %v550, %v549
    %v565 = vpack.c.b16 %v552, %v551
    %v566 = vpack.c.b16 %v554, %v553
    %v567 = vpack.c.b16 %v556, %v555
    %v568 = vpack.c.b16 %v558, %v557
    %v569 = vpack.c.b16 %v560, %v559
    %v570 = vpack.c.b16 %v562, %v561
    %579 = vmatprep.subr.bf16.mxu0 0
    %580 = vmatpush1.bf16.msra.mxu0 %v570
    %581 = vmatprep.subr.bf16.mxu0 0
    %582 = vmatpush1.bf16.msra.mxu0 %v569
    %583 = vmatprep.subr.bf16.mxu0 0
    %584 = vmatpush1.bf16.msra.mxu0 %v568
    %585 = vmatprep.subr.bf16.mxu0 0
    %586 = vmatpush1.bf16.msra.mxu0 %v567
    %587 = vmatprep.subr.bf16.mxu0 0
    %588 = vmatpush1.bf16.msra.mxu0 %v566
    %589 = vmatprep.subr.bf16.mxu0 0
    %590 = vmatpush1.bf16.msra.mxu0 %v565
    %591 = vmatprep.subr.bf16.mxu0 0
    %592 = vmatpush1.bf16.msra.mxu0 %v564
    %593 = vmatprep.subr.bf16.mxu0 0
    %594 = vmatpush1.bf16.msra.mxu0 %v563
    %595 = vmatprep.subr.bf16.mxu0 0
    %596 = vmatpush2.bf16.msra.mxu0 0
    %597 = vmatprep.subr.bf16.mxu0 0
    %598 = vmatpush2.bf16.msra.mxu0 0
    %599 = vmatprep.subr.bf16.mxu0 0
    %600 = vmatpush2.bf16.msra.mxu0 0
    %601 = vmatprep.subr.bf16.mxu0 0
    %602 = vmatpush2.bf16.msra.mxu0 0
    %603 = vmatprep.subr.bf16.mxu0 0
    %604 = vmatpush2.bf16.msra.mxu0 0
    %605 = vmatprep.subr.bf16.mxu0 0
    %606 = vmatpush2.bf16.msra.mxu0 0
    %607 = vmatprep.subr.bf16.mxu0 0
    %608 = vmatpush2.bf16.msra.mxu0 0
    %609 = vmatprep.subr.bf16.mxu0 0
    %610 = vmatpush2.bf16.msra.mxu0 0
    %611 = vmatprep.mubr.bf16.mxu0 0
    %612 = vmatmul.mubr.bf16.gmra.mxu0 %v529
    %v613 = vpop.f32.mrf.mxu0
    %v614 = vadd.f32 %v511, %v613
    %v615 = vpop.f32.mrf.mxu0
    %v616 = vpop.f32.mrf.mxu0
    %v617 = vpop.f32.mrf.mxu0
    %618 = vdwg.mxu0
    %v621 = vunpack.c.l.s4 1966171168
    %v622 = vunpack.c.0.s8 %v621
    %v623 = vlaneseq
    %v624 = vshrl.u32 %v623, 7
    %v625 = vsub.s32 %v622, %v624
    %v626 = vrot.slane %v614, %v625
    %v627 = vcombine.high %v626, %v626
    %v629 = vunpack.c.l.s4 1966171168
    %v630 = vunpack.c.0.s8 %v629
    %v631 = vlaneseq
    %v632 = vshrl.u32 %v631, 7
    %v633 = vsub.s32 %v630, %v632
    %v634 = vrot.slane %v626, %v633
    %v636 = vunpack.c.l.s4 1966171168
    %v637 = vunpack.c.0.s8 %v636
    %v638 = vlaneseq
    %v639 = vshrl.u32 %v638, 7
    %v640 = vsub.s32 %v637, %v639
    %v641 = vrot.slane %v627, %v640
    %v642 = vcombine.high %v634, %v634
    %v643 = vcombine.high %v641, %v641
    %v648 = vpack.c.bf16 %v634, %v634
    %v649 = vpack.c.bf16 %v641, %v641
    %v650 = vpack.c.bf16 %v642, %v642
    %v651 = vpack.c.bf16 %v643, %v643
    %v652 = vld [vmem:[#allocation5] sm:$0x1]
    %v653 = vld [vmem:[#allocation5 + $0x1] sm:$0x1]
    %v654 = vld [vmem:[#allocation5 + $0x2] sm:$0x1]
    %v655 = vld [vmem:[#allocation5 + $0x3] sm:$0x1]
    %656 = vmatprep.subr.bf16.mxu0 0
    %657 = vmatpush1.bf16.xpose.msra.mxu0 0
    %658 = vmatprep.subr.bf16.mxu0 0
    %659 = vmatpush1.bf16.xpose.msra.mxu0 0
    %660 = vmatprep.subr.bf16.mxu0 0
    %661 = vmatpush1.bf16.xpose.msra.mxu0 0
    %662 = vmatprep.subr.bf16.mxu0 0
    %663 = vmatpush1.bf16.xpose.msra.mxu0 0
    %664 = vmatprep.subr.bf16.mxu0 0
    %665 = vmatpush1.bf16.xpose.msra.mxu0 0
    %666 = vmatprep.subr.bf16.mxu0 0
    %667 = vmatpush1.bf16.xpose.msra.mxu0 0
    %668 = vmatprep.subr.bf16.mxu0 0
    %669 = vmatpush1.bf16.xpose.msra.mxu0 0
    %670 = vmatprep.subr.bf16.mxu0 0
    %671 = vmatpush1.bf16.xpose.msra.mxu0 %v480
    %672 = vmatprep.subr.bf16.mxu0 0
    %673 = vmatpush2.bf16.xpose.msra.mxu0 0
    %674 = vmatprep.subr.bf16.mxu0 0
    %675 = vmatpush2.bf16.xpose.msra.mxu0 0
    %676 = vmatprep.subr.bf16.mxu0 0
    %677 = vmatpush2.bf16.xpose.msra.mxu0 0
    %678 = vmatprep.subr.bf16.mxu0 0
    %679 = vmatpush2.bf16.xpose.msra.mxu0 0
    %680 = vmatprep.subr.bf16.mxu0 0
    %681 = vmatpush2.bf16.xpose.msra.mxu0 0
    %682 = vmatprep.subr.bf16.mxu0 0
    %683 = vmatpush2.bf16.xpose.msra.mxu0 0
    %684 = vmatprep.subr.bf16.mxu0 0
    %685 = vmatpush2.bf16.xpose.msra.mxu0 0
    %686 = vmatprep.subr.bf16.mxu0 0
    %687 = vmatpush2.bf16.xpose.msra.mxu0 0
    %688 = vmatprep.mubr.bf16.mxu0 0
    %689 = vmatmul.mubr.bf16.gmra.mxu0 %v648
    %v690 = vpop.f32.mrf.mxu0
    %v691 = vadd.f32 %v652, %v690
    %v692 = vpop.f32.mrf.mxu0
    %v693 = vpop.f32.mrf.mxu0
    %v694 = vpop.f32.mrf.mxu0
    %695 = vdwg.mxu0
    %696 = vmatprep.subr.bf16.mxu0 0
    %697 = vmatpush1.bf16.xpose.msra.mxu0 0
    %698 = vmatprep.subr.bf16.mxu0 0
    %699 = vmatpush1.bf16.xpose.msra.mxu0 0
    %700 = vmatprep.subr.bf16.mxu0 0
    %701 = vmatpush1.bf16.xpose.msra.mxu0 0
    %702 = vmatprep.subr.bf16.mxu0 0
    %703 = vmatpush1.bf16.xpose.msra.mxu0 0
    %704 = vmatprep.subr.bf16.mxu0 0
    %705 = vmatpush1.bf16.xpose.msra.mxu0 0
    %706 = vmatprep.subr.bf16.mxu0 0
    %707 = vmatpush1.bf16.xpose.msra.mxu0 0
    %708 = vmatprep.subr.bf16.mxu0 0
    %709 = vmatpush1.bf16.xpose.msra.mxu0 0
    %710 = vmatprep.subr.bf16.mxu0 0
    %711 = vmatpush1.bf16.xpose.msra.mxu0 %v481
    %712 = vmatprep.subr.bf16.mxu0 0
    %713 = vmatpush2.bf16.xpose.msra.mxu0 0
    %714 = vmatprep.subr.bf16.mxu0 0
    %715 = vmatpush2.bf16.xpose.msra.mxu0 0
    %716 = vmatprep.subr.bf16.mxu0 0
    %717 = vmatpush2.bf16.xpose.msra.mxu0 0
    %718 = vmatprep.subr.bf16.mxu0 0
    %719 = vmatpush2.bf16.xpose.msra.mxu0 0
    %720 = vmatprep.subr.bf16.mxu0 0
    %721 = vmatpush2.bf16.xpose.msra.mxu0 0
    %722 = vmatprep.subr.bf16.mxu0 0
    %723 = vmatpush2.bf16.xpose.msra.mxu0 0
    %724 = vmatprep.subr.bf16.mxu0 0
    %725 = vmatpush2.bf16.xpose.msra.mxu0 0
    %726 = vmatprep.subr.bf16.mxu0 0
    %727 = vmatpush2.bf16.xpose.msra.mxu0 0
    %728 = vmatprep.mubr.bf16.mxu0 0
    %729 = vmatmul.mubr.bf16.gmra.mxu0 %v649
    %v730 = vpop.f32.mrf.mxu0
    %v731 = vadd.f32 %v653, %v730
    %v732 = vpop.f32.mrf.mxu0
    %v733 = vpop.f32.mrf.mxu0
    %v734 = vpop.f32.mrf.mxu0
    %735 = vdwg.mxu0
    %736 = vmatprep.subr.bf16.mxu0 0
    %737 = vmatpush1.bf16.xpose.msra.mxu0 0
    %738 = vmatprep.subr.bf16.mxu0 0
    %739 = vmatpush1.bf16.xpose.msra.mxu0 0
    %740 = vmatprep.subr.bf16.mxu0 0
    %741 = vmatpush1.bf16.xpose.msra.mxu0 0
    %742 = vmatprep.subr.bf16.mxu0 0
    %743 = vmatpush1.bf16.xpose.msra.mxu0 0
    %744 = vmatprep.subr.bf16.mxu0 0
    %745 = vmatpush1.bf16.xpose.msra.mxu0 0
    %746 = vmatprep.subr.bf16.mxu0 0
    %747 = vmatpush1.bf16.xpose.msra.mxu0 0
    %748 = vmatprep.subr.bf16.mxu0 0
    %749 = vmatpush1.bf16.xpose.msra.mxu0 0
    %750 = vmatprep.subr.bf16.mxu0 0
    %751 = vmatpush1.bf16.xpose.msra.mxu0 %v482
    %752 = vmatprep.subr.bf16.mxu0 0
    %753 = vmatpush2.bf16.xpose.msra.mxu0 0
    %754 = vmatprep.subr.bf16.mxu0 0
    %755 = vmatpush2.bf16.xpose.msra.mxu0 0
    %756 = vmatprep.subr.bf16.mxu0 0
    %757 = vmatpush2.bf16.xpose.msra.mxu0 0
    %758 = vmatprep.subr.bf16.mxu0 0
    %759 = vmatpush2.bf16.xpose.msra.mxu0 0
    %760 = vmatprep.subr.bf16.mxu0 0
    %761 = vmatpush2.bf16.xpose.msra.mxu0 0
    %762 = vmatprep.subr.bf16.mxu0 0
    %763 = vmatpush2.bf16.xpose.msra.mxu0 0
    %764 = vmatprep.subr.bf16.mxu0 0
    %765 = vmatpush2.bf16.xpose.msra.mxu0 0
    %766 = vmatprep.subr.bf16.mxu0 0
    %767 = vmatpush2.bf16.xpose.msra.mxu0 0
    %768 = vmatprep.mubr.bf16.mxu0 0
    %769 = vmatmul.mubr.bf16.gmra.mxu0 %v650
    %v770 = vpop.f32.mrf.mxu0
    %v771 = vadd.f32 %v654, %v770
    %v772 = vpop.f32.mrf.mxu0
    %v773 = vpop.f32.mrf.mxu0
    %v774 = vpop.f32.mrf.mxu0
    %775 = vdwg.mxu0
    %776 = vmatprep.subr.bf16.mxu0 0
    %777 = vmatpush1.bf16.xpose.msra.mxu0 0
    %778 = vmatprep.subr.bf16.mxu0 0
    %779 = vmatpush1.bf16.xpose.msra.mxu0 0
    %780 = vmatprep.subr.bf16.mxu0 0
    %781 = vmatpush1.bf16.xpose.msra.mxu0 0
    %782 = vmatprep.subr.bf16.mxu0 0
    %783 = vmatpush1.bf16.xpose.msra.mxu0 0
    %784 = vmatprep.subr.bf16.mxu0 0
    %785 = vmatpush1.bf16.xpose.msra.mxu0 0
    %786 = vmatprep.subr.bf16.mxu0 0
    %787 = vmatpush1.bf16.xpose.msra.mxu0 0
    %788 = vmatprep.subr.bf16.mxu0 0
    %789 = vmatpush1.bf16.xpose.msra.mxu0 0
    %790 = vmatprep.subr.bf16.mxu0 0
    %791 = vmatpush1.bf16.xpose.msra.mxu0 %v483
    %792 = vmatprep.subr.bf16.mxu0 0
    %793 = vmatpush2.bf16.xpose.msra.mxu0 0
    %794 = vmatprep.subr.bf16.mxu0 0
    %795 = vmatpush2.bf16.xpose.msra.mxu0 0
    %796 = vmatprep.subr.bf16.mxu0 0
    %797 = vmatpush2.bf16.xpose.msra.mxu0 0
    %798 = vmatprep.subr.bf16.mxu0 0
    %799 = vmatpush2.bf16.xpose.msra.mxu0 0
    %800 = vmatprep.subr.bf16.mxu0 0
    %801 = vmatpush2.bf16.xpose.msra.mxu0 0
    %802 = vmatprep.subr.bf16.mxu0 0
    %803 = vmatpush2.bf16.xpose.msra.mxu0 0
    %804 = vmatprep.subr.bf16.mxu0 0
    %805 = vmatpush2.bf16.xpose.msra.mxu0 0
    %806 = vmatprep.subr.bf16.mxu0 0
    %807 = vmatpush2.bf16.xpose.msra.mxu0 0
    %808 = vmatprep.mubr.bf16.mxu0 0
    %809 = vmatmul.mubr.bf16.gmra.mxu0 %v651
    %v810 = vpop.f32.mrf.mxu0
    %v811 = vadd.f32 %v655, %v810
    %v812 = vpop.f32.mrf.mxu0
    %v813 = vpop.f32.mrf.mxu0
    %v814 = vpop.f32.mrf.mxu0
    %815 = vdwg.mxu0
    %vm816 = vcmask 57344
    %v817 = vsel %vm816, %v691, -inf
    %818 = vmax.xlane.f32.xlu0 %v817
    %v819 = vpop.xlane.xlu0 %818
    %v820 = vsel %vm816, %v731, -inf
    %821 = vmax.xlane.f32.xlu0 %v820
    %v822 = vpop.xlane.xlu0 %821
    %v823 = vsel %vm816, %v771, -inf
    %824 = vmax.xlane.f32.xlu0 %v823
    %v825 = vpop.xlane.xlu0 %824
    %v826 = vsel %vm816, %v811, -inf
    %827 = vmax.xlane.f32.xlu0 %v826
    %v828 = vpop.xlane.xlu0 %827
    %v829 = vsub.f32 %v691, %v819
    %v830 = vsub.f32 %v731, %v822
    %v831 = vsub.f32 %v771, %v825
    %v832 = vsub.f32 %v811, %v828
    %v833 = vmul.f32 %v829, 1.442695
    %v834 = vpow.pop %v833
    %v835 = vmul.f32 %v830, 1.442695
    %v836 = vpow.pop %v835
    %v837 = vmul.f32 %v831, 1.442695
    %v838 = vpow.pop %v837
    %v839 = vmul.f32 %v832, 1.442695
    %v840 = vpow.pop %v839
    %v841 = vsel %vm816, %v834, 0.0
    %842 = vadd.xlane.f32.xlu0 %v841
    %v843 = vpop.xlane.xlu0 %842
    %v844 = vsel %vm816, %v836, 0.0
    %845 = vadd.xlane.f32.xlu0 %v844
    %v846 = vpop.xlane.xlu0 %845
    %v847 = vsel %vm816, %v838, 0.0
    %848 = vadd.xlane.f32.xlu0 %v847
    %v849 = vpop.xlane.xlu0 %848
    %v850 = vsel %vm816, %v840, 0.0
    %851 = vadd.xlane.f32.xlu0 %v850
    %v852 = vpop.xlane.xlu0 %851
    %v853 = vrcp.pop %v843
    %v854 = vmul.f32 %v834, %v853
    %v855 = vrcp.pop %v846
    %v856 = vmul.f32 %v836, %v855
    %v857 = vrcp.pop %v849
    %v858 = vmul.f32 %v838, %v857
    %v859 = vrcp.pop %v852
    %v860 = vmul.f32 %v840, %v859
    %v861 = vpack.c.bf16 %v854, %v854
    %v862 = vpack.c.bf16 %v856, %v856
    %v863 = vpack.c.bf16 %v858, %v858
    %v864 = vpack.c.bf16 %v860, %v860
    %vm865 = vcmask 64512
    %v867 = vsel %vm865, %v861, 0
    %vm869 = vcmask 1043456
    %v871 = vsel %vm869, %v484, 0
    %873 = vmatprep.subr.bf16.mxu0 0
    %874 = vmatpush1.bf16.msra.mxu0 0
    %875 = vmatprep.subr.bf16.mxu0 0
    %876 = vmatpush1.bf16.msra.mxu0 0
    %877 = vmatprep.subr.bf16.mxu0 0
    %878 = vmatpush1.bf16.msra.mxu0 0
    %879 = vmatprep.subr.bf16.mxu0 0
    %880 = vmatpush1.bf16.msra.mxu0 0
    %881 = vmatprep.subr.bf16.mxu0 0
    %882 = vmatpush1.bf16.msra.mxu0 0
    %883 = vmatprep.subr.bf16.mxu0 0
    %884 = vmatpush1.bf16.msra.mxu0 0
    %885 = vmatprep.subr.bf16.mxu0 0
    %886 = vmatpush1.bf16.msra.mxu0 0
    %887 = vmatprep.subr.bf16.mxu0 0
    %888 = vmatpush1.bf16.msra.mxu0 %v871
    %889 = vmatprep.subr.bf16.mxu0 0
    %890 = vmatpush2.bf16.msra.mxu0 0
    %891 = vmatprep.subr.bf16.mxu0 0
    %892 = vmatpush2.bf16.msra.mxu0 0
    %893 = vmatprep.subr.bf16.mxu0 0
    %894 = vmatpush2.bf16.msra.mxu0 0
    %895 = vmatprep.subr.bf16.mxu0 0
    %896 = vmatpush2.bf16.msra.mxu0 0
    %897 = vmatprep.subr.bf16.mxu0 0
    %898 = vmatpush2.bf16.msra.mxu0 0
    %899 = vmatprep.subr.bf16.mxu0 0
    %900 = vmatpush2.bf16.msra.mxu0 0
    %901 = vmatprep.subr.bf16.mxu0 0
    %902 = vmatpush2.bf16.msra.mxu0 0
    %903 = vmatprep.subr.bf16.mxu0 0
    %904 = vmatpush2.bf16.msra.mxu0 0
    %905 = vmatprep.mubr.bf16.mxu0 0
    %906 = vmatmul.mubr.bf16.gmra.mxu0 %v867
    %v907 = vpop.f32.mrf.mxu0
    %v908 = vadd.f32 0.0, %v907
    %v909 = vpop.f32.mrf.mxu0
    %v910 = vpop.f32.mrf.mxu0
    %v911 = vpop.f32.mrf.mxu0
    %912 = vdwg.mxu0
    %v914 = vsel %vm865, %v862, 0
    %v917 = vsel %vm869, %v485, 0
    %919 = vmatprep.subr.bf16.mxu0 0
    %920 = vmatpush1.bf16.msra.mxu0 0
    %921 = vmatprep.subr.bf16.mxu0 0
    %922 = vmatpush1.bf16.msra.mxu0 0
    %923 = vmatprep.subr.bf16.mxu0 0
    %924 = vmatpush1.bf16.msra.mxu0 0
    %925 = vmatprep.subr.bf16.mxu0 0
    %926 = vmatpush1.bf16.msra.mxu0 0
    %927 = vmatprep.subr.bf16.mxu0 0
    %928 = vmatpush1.bf16.msra.mxu0 0
    %929 = vmatprep.subr.bf16.mxu0 0
    %930 = vmatpush1.bf16.msra.mxu0 0
    %931 = vmatprep.subr.bf16.mxu0 0
    %932 = vmatpush1.bf16.msra.mxu0 0
    %933 = vmatprep.subr.bf16.mxu0 0
    %934 = vmatpush1.bf16.msra.mxu0 %v917
    %935 = vmatprep.subr.bf16.mxu0 0
    %936 = vmatpush2.bf16.msra.mxu0 0
    %937 = vmatprep.subr.bf16.mxu0 0
    %938 = vmatpush2.bf16.msra.mxu0 0
    %939 = vmatprep.subr.bf16.mxu0 0
    %940 = vmatpush2.bf16.msra.mxu0 0
    %941 = vmatprep.subr.bf16.mxu0 0
    %942 = vmatpush2.bf16.msra.mxu0 0
    %943 = vmatprep.subr.bf16.mxu0 0
    %944 = vmatpush2.bf16.msra.mxu0 0
    %945 = vmatprep.subr.bf16.mxu0 0
    %946 = vmatpush2.bf16.msra.mxu0 0
    %947 = vmatprep.subr.bf16.mxu0 0
    %948 = vmatpush2.bf16.msra.mxu0 0
    %949 = vmatprep.subr.bf16.mxu0 0
    %950 = vmatpush2.bf16.msra.mxu0 0
    %951 = vmatprep.mubr.bf16.mxu0 0
    %952 = vmatmul.mubr.bf16.gmra.mxu0 %v914
    %v953 = vpop.f32.mrf.mxu0
    %v954 = vadd.f32 0.0, %v953
    %v955 = vpop.f32.mrf.mxu0
    %v956 = vpop.f32.mrf.mxu0
    %v957 = vpop.f32.mrf.mxu0
    %958 = vdwg.mxu0
    %v960 = vsel %vm865, %v863, 0
    %v963 = vsel %vm869, %v486, 0
    %965 = vmatprep.subr.bf16.mxu0 0
    %966 = vmatpush1.bf16.msra.mxu0 0
    %967 = vmatprep.subr.bf16.mxu0 0
    %968 = vmatpush1.bf16.msra.mxu0 0
    %969 = vmatprep.subr.bf16.mxu0 0
    %970 = vmatpush1.bf16.msra.mxu0 0
    %971 = vmatprep.subr.bf16.mxu0 0
    %972 = vmatpush1.bf16.msra.mxu0 0
    %973 = vmatprep.subr.bf16.mxu0 0
    %974 = vmatpush1.bf16.msra.mxu0 0
    %975 = vmatprep.subr.bf16.mxu0 0
    %976 = vmatpush1.bf16.msra.mxu0 0
    %977 = vmatprep.subr.bf16.mxu0 0
    %978 = vmatpush1.bf16.msra.mxu0 0
    %979 = vmatprep.subr.bf16.mxu0 0
    %980 = vmatpush1.bf16.msra.mxu0 %v963
    %981 = vmatprep.subr.bf16.mxu0 0
    %982 = vmatpush2.bf16.msra.mxu0 0
    %983 = vmatprep.subr.bf16.mxu0 0
    %984 = vmatpush2.bf16.msra.mxu0 0
    %985 = vmatprep.subr.bf16.mxu0 0
    %986 = vmatpush2.bf16.msra.mxu0 0
    %987 = vmatprep.subr.bf16.mxu0 0
    %988 = vmatpush2.bf16.msra.mxu0 0
    %989 = vmatprep.subr.bf16.mxu0 0
    %990 = vmatpush2.bf16.msra.mxu0 0
    %991 = vmatprep.subr.bf16.mxu0 0
    %992 = vmatpush2.bf16.msra.mxu0 0
    %993 = vmatprep.subr.bf16.mxu0 0
    %994 = vmatpush2.bf16.msra.mxu0 0
    %995 = vmatprep.subr.bf16.mxu0 0
    %996 = vmatpush2.bf16.msra.mxu0 0
    %997 = vmatprep.mubr.bf16.mxu0 0
    %998 = vmatmul.mubr.bf16.gmra.mxu0 %v960
    %v999 = vpop.f32.mrf.mxu0
    %v1000 = vadd.f32 0.0, %v999
    %v1001 = vpop.f32.mrf.mxu0
    %v1002 = vpop.f32.mrf.mxu0
    %v1003 = vpop.f32.mrf.mxu0
    %1004 = vdwg.mxu0
    %v1006 = vsel %vm865, %v864, 0
    %v1009 = vsel %vm869, %v487, 0
    %1011 = vmatprep.subr.bf16.mxu0 0
    %1012 = vmatpush1.bf16.msra.mxu0 0
    %1013 = vmatprep.subr.bf16.mxu0 0
    %1014 = vmatpush1.bf16.msra.mxu0 0
    %1015 = vmatprep.subr.bf16.mxu0 0
    %1016 = vmatpush1.bf16.msra.mxu0 0
    %1017 = vmatprep.subr.bf16.mxu0 0
    %1018 = vmatpush1.bf16.msra.mxu0 0
    %1019 = vmatprep.subr.bf16.mxu0 0
    %1020 = vmatpush1.bf16.msra.mxu0 0
    %1021 = vmatprep.subr.bf16.mxu0 0
    %1022 = vmatpush1.bf16.msra.mxu0 0
    %1023 = vmatprep.subr.bf16.mxu0 0
    %1024 = vmatpush1.bf16.msra.mxu0 0
    %1025 = vmatprep.subr.bf16.mxu0 0
    %1026 = vmatpush1.bf16.msra.mxu0 %v1009
    %1027 = vmatprep.subr.bf16.mxu0 0
    %1028 = vmatpush2.bf16.msra.mxu0 0
    %1029 = vmatprep.subr.bf16.mxu0 0
    %1030 = vmatpush2.bf16.msra.mxu0 0
    %1031 = vmatprep.subr.bf16.mxu0 0
    %1032 = vmatpush2.bf16.msra.mxu0 0
    %1033 = vmatprep.subr.bf16.mxu0 0
    %1034 = vmatpush2.bf16.msra.mxu0 0
    %1035 = vmatprep.subr.bf16.mxu0 0
    %1036 = vmatpush2.bf16.msra.mxu0 0
    %1037 = vmatprep.subr.bf16.mxu0 0
    %1038 = vmatpush2.bf16.msra.mxu0 0
    %1039 = vmatprep.subr.bf16.mxu0 0
    %1040 = vmatpush2.bf16.msra.mxu0 0
    %1041 = vmatprep.subr.bf16.mxu0 0
    %1042 = vmatpush2.bf16.msra.mxu0 0
    %1043 = vmatprep.mubr.bf16.mxu0 0
    %1044 = vmatmul.mubr.bf16.gmra.mxu0 %v1006
    %v1045 = vpop.f32.mrf.mxu0
    %v1046 = vadd.f32 0.0, %v1045
    %v1047 = vpop.f32.mrf.mxu0
    %v1048 = vpop.f32.mrf.mxu0
    %v1049 = vpop.f32.mrf.mxu0
    %1050 = vdwg.mxu0
    %v1051 = vpack.c.bf16 %v908, %v908
    %v1052 = vpack.c.bf16 %v954, %v954
    %v1053 = vpack.c.bf16 %v1000, %v1000
    %v1054 = vpack.c.bf16 %v1046, %v1046
    %v1055 = vld [vmem:[#allocation11] sm:$0xf]
    %v1056 = vld [vmem:[#allocation11 + $0x4] sm:$0xf]
    %v1057 = vld [vmem:[#allocation11 + $0x8] sm:$0xf]
    %v1058 = vld [vmem:[#allocation11 + $0xc] sm:$0xf]
    %v1059 = vld [vmem:[#allocation11 + $0x10] sm:$0xf]
    %v1060 = vld [vmem:[#allocation11 + $0x14] sm:$0xf]
    %v1061 = vld [vmem:[#allocation11 + $0x18] sm:$0xf]
    %v1062 = vld [vmem:[#allocation11 + $0x1c] sm:$0xf]
    %v1063 = vld [vmem:[#allocation11 + $0x20] sm:$0xf]
    %v1064 = vld [vmem:[#allocation11 + $0x24] sm:$0xf]
    %v1065 = vld [vmem:[#allocation11 + $0x28] sm:$0xf]
    %v1066 = vld [vmem:[#allocation11 + $0x2c] sm:$0xf]
    %v1067 = vld [vmem:[#allocation11 + $0x30] sm:$0xf]
    %v1068 = vld [vmem:[#allocation11 + $0x34] sm:$0xf]
    %v1069 = vld [vmem:[#allocation11 + $0x38] sm:$0xf]
    %v1070 = vld [vmem:[#allocation11 + $0x3c] sm:$0xf]
    %v1071 = vlaneseq
    %v1072 = vshrl.u32 %v1071, 7
    %v1073 = vsub.s32 5, %v1072
    %v1074 = vrot.slane %v165, %v1073
    %v1079 = vunpack.c.l.b16 %v1051
    %v1080 = vunpack.c.l.b16 %v1052
    %v1081 = vunpack.c.l.b16 %v1053
    %v1082 = vunpack.c.l.b16 %v1054
    %v1083 = vrot.slane %v1080, 7
    %v1084 = vsel %vm521, %v1083, %v1079
    %v1085 = vrot.slane %v1081, 6
    %v1086 = vsel %vm524, %v1085, %v1084
    %v1087 = vrot.slane %v1082, 5
    %v1088 = vsel %vm527, %v1087, %v1086
    %v1089 = vpack.c.b16 %v1088, %v1088
    %v1107 = vunpack.c.l.b16 %v1055
    %v1108 = vunpack.c.l.b16 %v1056
    %v1109 = vunpack.c.l.b16 %v1057
    %v1110 = vunpack.c.l.b16 %v1058
    %v1111 = vunpack.c.l.b16 %v1059
    %v1112 = vunpack.c.l.b16 %v1060
    %v1113 = vunpack.c.l.b16 %v1061
    %v1114 = vunpack.c.l.b16 %v1062
    %v1115 = vunpack.c.l.b16 %v1063
    %v1116 = vunpack.c.l.b16 %v1064
    %v1117 = vunpack.c.l.b16 %v1065
    %v1118 = vunpack.c.l.b16 %v1066
    %v1119 = vunpack.c.l.b16 %v1067
    %v1120 = vunpack.c.l.b16 %v1068
    %v1121 = vunpack.c.l.b16 %v1069
    %v1122 = vunpack.c.l.b16 %v1070
    %v1123 = vpack.c.b16 %v1108, %v1107
    %v1124 = vpack.c.b16 %v1110, %v1109
    %v1125 = vpack.c.b16 %v1112, %v1111
    %v1126 = vpack.c.b16 %v1114, %v1113
    %v1127 = vpack.c.b16 %v1116, %v1115
    %v1128 = vpack.c.b16 %v1118, %v1117
    %v1129 = vpack.c.b16 %v1120, %v1119
    %v1130 = vpack.c.b16 %v1122, %v1121
    %1139 = vmatprep.subr.bf16.mxu0 0
    %1140 = vmatpush1.bf16.msra.mxu0 %v1130
    %1141 = vmatprep.subr.bf16.mxu0 0
    %1142 = vmatpush1.bf16.msra.mxu0 %v1129
    %1143 = vmatprep.subr.bf16.mxu0 0
    %1144 = vmatpush1.bf16.msra.mxu0 %v1128
    %1145 = vmatprep.subr.bf16.mxu0 0
    %1146 = vmatpush1.bf16.msra.mxu0 %v1127
    %1147 = vmatprep.subr.bf16.mxu0 0
    %1148 = vmatpush1.bf16.msra.mxu0 %v1126
    %1149 = vmatprep.subr.bf16.mxu0 0
    %1150 = vmatpush1.bf16.msra.mxu0 %v1125
    %1151 = vmatprep.subr.bf16.mxu0 0
    %1152 = vmatpush1.bf16.msra.mxu0 %v1124
    %1153 = vmatprep.subr.bf16.mxu0 0
    %1154 = vmatpush1.bf16.msra.mxu0 %v1123
    %1155 = vmatprep.subr.bf16.mxu0 0
    %1156 = vmatpush2.bf16.msra.mxu0 0
    %1157 = vmatprep.subr.bf16.mxu0 0
    %1158 = vmatpush2.bf16.msra.mxu0 0
    %1159 = vmatprep.subr.bf16.mxu0 0
    %1160 = vmatpush2.bf16.msra.mxu0 0
    %1161 = vmatprep.subr.bf16.mxu0 0
    %1162 = vmatpush2.bf16.msra.mxu0 0
    %1163 = vmatprep.subr.bf16.mxu0 0
    %1164 = vmatpush2.bf16.msra.mxu0 0
    %1165 = vmatprep.subr.bf16.mxu0 0
    %1166 = vmatpush2.bf16.msra.mxu0 0
    %1167 = vmatprep.subr.bf16.mxu0 0
    %1168 = vmatpush2.bf16.msra.mxu0 0
    %1169 = vmatprep.subr.bf16.mxu0 0
    %1170 = vmatpush2.bf16.msra.mxu0 0
    %1171 = vmatprep.mubr.bf16.mxu0 0
    %1172 = vmatmul.mubr.bf16.gmra.mxu0 %v1089
    %v1173 = vpop.f32.mrf.mxu0
    %v1174 = vadd.f32 %v1074, %v1173
    %v1175 = vpop.f32.mrf.mxu0
    %v1176 = vpop.f32.mrf.mxu0
    %v1177 = vpop.f32.mrf.mxu0
    %1178 = vdwg.mxu0
    %v1180 = vrot.slane %v1174, 1
    %v1181 = vrot.slane %v1174, 2
    %v1182 = vrot.slane %v1174, 3
    %v1187 = vadd.f32 %v240, %v1174
    %v1188 = vadd.f32 %v241, %v1180
    %v1189 = vadd.f32 %v242, %v1181
    %v1190 = vadd.f32 %v243, %v1182
    %v1195 = vrot.slane %v1188, 7
    %v1196 = vsel %vm521, %v1195, %v1187
    %v1197 = vrot.slane %v1189, 6
    %v1198 = vsel %vm524, %v1197, %v1196
    %v1199 = vrot.slane %v1190, 5
    %v1200 = vsel %vm527, %v1199, %v1198
    %v1202 = vsel %vm869, %v1200, 0.0
    %1203 = vadd.xlane.f32.xlu0 %v1202
    %v1204 = vpop.xlane.xlu0 %1203
    %v1205 = vmul.f32 %v1204, %v183
    %v1206 = vmul.f32 %v1187, %v1187
    %v1207 = vmul.f32 %v1188, %v1188
    %v1208 = vmul.f32 %v1189, %v1189
    %v1209 = vmul.f32 %v1190, %v1190
    %v1214 = vrot.slane %v1207, 7
    %v1215 = vsel %vm521, %v1214, %v1206
    %v1216 = vrot.slane %v1208, 6
    %v1217 = vsel %vm524, %v1216, %v1215
    %v1218 = vrot.slane %v1209, 5
    %v1219 = vsel %vm527, %v1218, %v1217
    %v1221 = vsel %vm869, %v1219, 0.0
    %1222 = vadd.xlane.f32.xlu0 %v1221
    %v1223 = vpop.xlane.xlu0 %1222
    %v1224 = vmul.f32 %v1223, %v183
    %v1225 = vmul.f32 %v1205, %v1205
    %v1226 = vsub.f32 %v1224, %v1225
    %v1227 = vadd.f32 %v1226, 1e-12
    %v1228 = vrsqrt.pop %v1227
    %v1230 = vrot.slane %v1205, 1
    %v1231 = vrot.slane %v1205, 2
    %v1232 = vrot.slane %v1205, 3
    %v1237 = vsub.f32 %v1187, %v1205
    %v1238 = vsub.f32 %v1188, %v1230
    %v1239 = vsub.f32 %v1189, %v1231
    %v1240 = vsub.f32 %v1190, %v1232
    %v1242 = vrot.slane %v1228, 1
    %v1243 = vrot.slane %v1228, 2
    %v1244 = vrot.slane %v1228, 3
    %v1249 = vmul.f32 %v1237, %v1228
    %v1250 = vmul.f32 %v1238, %v1242
    %v1251 = vmul.f32 %v1239, %v1243
    %v1252 = vmul.f32 %v1240, %v1244
    %v1253 = vlaneseq
    %v1254 = vshrl.u32 %v1253, 7
    %v1255 = vsub.s32 6, %v1254
    %v1256 = vrot.slane %v165, %v1255
    %v1257 = vmul.f32 %v1249, %v1256
    %v1258 = vmul.f32 %v1250, %v1256
    %v1259 = vmul.f32 %v1251, %v1256
    %v1260 = vmul.f32 %v1252, %v1256
    %v1261 = vlaneseq
    %v1262 = vshrl.u32 %v1261, 7
    %v1263 = vsub.s32 7, %v1262
    %v1264 = vrot.slane %v165, %v1263
    %v1265 = vadd.f32 %v1257, %v1264
    %v1266 = vadd.f32 %v1258, %v1264
    %v1267 = vadd.f32 %v1259, %v1264
    %v1268 = vadd.f32 %v1260, %v1264
    %v1269 = vpack.c.bf16 %v1265, %v1265
    %v1270 = vpack.c.bf16 %v1266, %v1266
    %v1271 = vpack.c.bf16 %v1267, %v1267
    %v1272 = vpack.c.bf16 %v1268, %v1268
    %v1273 = vld [vmem:[#allocation13] sm:$0xff]
    %v1274 = vld [vmem:[#allocation13 + $0x8] sm:$0xff]
    %v1275 = vld [vmem:[#allocation13 + $0x10] sm:$0xff]
    %v1276 = vld [vmem:[#allocation13 + $0x18] sm:$0xff]
    %v1277 = vld [vmem:[#allocation13 + $0x20] sm:$0xff]
    %v1278 = vld [vmem:[#allocation13 + $0x28] sm:$0xff]
    %v1279 = vld [vmem:[#allocation13 + $0x30] sm:$0xff]
    %v1280 = vld [vmem:[#allocation13 + $0x38] sm:$0xff]
    %v1281 = vld [vmem:[#allocation13 + $0x40] sm:$0xff]
    %v1282 = vld [vmem:[#allocation13 + $0x48] sm:$0xff]
    %v1283 = vld [vmem:[#allocation13 + $0x50] sm:$0xff]
    %v1284 = vld [vmem:[#allocation13 + $0x58] sm:$0xff]
    %v1285 = vld [vmem:[#allocation13 + $0x60] sm:$0xff]
    %v1286 = vld [vmem:[#allocation13 + $0x68] sm:$0xff]
    %v1287 = vld [vmem:[#allocation13 + $0x70] sm:$0xff]
    %v1288 = vld [vmem:[#allocation13 + $0x78] sm:$0xff]
    %v1289 = vld [vmem:[%s10] sm:$0x3]
    %v1291 = vlaneseq
    %v1292 = vshrl.u32 %v1291, 7
    %v1293 = vsub.s32 0, %v1292
    %v1294 = vrot.slane %v1289, %v1293
    %v1295 = vlaneseq
    %v1296 = vshrl.u32 %v1295, 7
    %v1297 = vsub.s32 1, %v1296
    %v1298 = vrot.slane %v1289, %v1297
    %v1305 = vunpack.c.l.b16 %v1269
    %v1306 = vunpack.c.l.b16 %v1270
    %v1307 = vunpack.c.l.b16 %v1271
    %v1308 = vunpack.c.l.b16 %v1272
    %v1309 = vrot.slane %v1306, 7
    %v1310 = vsel %vm521, %v1309, %v1305
    %v1311 = vrot.slane %v1307, 6
    %v1312 = vsel %vm524, %v1311, %v1310
    %v1313 = vrot.slane %v1308, 5
    %v1314 = vsel %vm527, %v1313, %v1312
    %v1315 = vpack.c.b16 %v1314, %v1314
    %v1333 = vunpack.c.l.b16 %v1273
    %v1334 = vunpack.c.h.b16 %v1273
    %v1335 = vunpack.c.l.b16 %v1274
    %v1336 = vunpack.c.h.b16 %v1274
    %v1337 = vunpack.c.l.b16 %v1275
    %v1338 = vunpack.c.h.b16 %v1275
    %v1339 = vunpack.c.l.b16 %v1276
    %v1340 = vunpack.c.h.b16 %v1276
    %v1341 = vunpack.c.l.b16 %v1277
    %v1342 = vunpack.c.h.b16 %v1277
    %v1343 = vunpack.c.l.b16 %v1278
    %v1344 = vunpack.c.h.b16 %v1278
    %v1345 = vunpack.c.l.b16 %v1279
    %v1346 = vunpack.c.h.b16 %v1279
    %v1347 = vunpack.c.l.b16 %v1280
    %v1348 = vunpack.c.h.b16 %v1280
    %v1349 = vunpack.c.l.b16 %v1281
    %v1350 = vunpack.c.h.b16 %v1281
    %v1351 = vunpack.c.l.b16 %v1282
    %v1352 = vunpack.c.h.b16 %v1282
    %v1353 = vunpack.c.l.b16 %v1283
    %v1354 = vunpack.c.h.b16 %v1283
    %v1355 = vunpack.c.l.b16 %v1284
    %v1356 = vunpack.c.h.b16 %v1284
    %v1357 = vunpack.c.l.b16 %v1285
    %v1358 = vunpack.c.h.b16 %v1285
    %v1359 = vunpack.c.l.b16 %v1286
    %v1360 = vunpack.c.h.b16 %v1286
    %v1361 = vunpack.c.l.b16 %v1287
    %v1362 = vunpack.c.h.b16 %v1287
    %v1363 = vunpack.c.l.b16 %v1288
    %v1364 = vunpack.c.h.b16 %v1288
    %v1365 = vpack.c.b16 %v1335, %v1333
    %v1366 = vpack.c.b16 %v1336, %v1334
    %v1367 = vpack.c.b16 %v1339, %v1337
    %v1368 = vpack.c.b16 %v1340, %v1338
    %v1369 = vpack.c.b16 %v1343, %v1341
    %v1370 = vpack.c.b16 %v1344, %v1342
    %v1371 = vpack.c.b16 %v1347, %v1345
    %v1372 = vpack.c.b16 %v1348, %v1346
    %v1373 = vpack.c.b16 %v1351, %v1349
    %v1374 = vpack.c.b16 %v1352, %v1350
    %v1375 = vpack.c.b16 %v1355, %v1353
    %v1376 = vpack.c.b16 %v1356, %v1354
    %v1377 = vpack.c.b16 %v1359, %v1357
    %v1378 = vpack.c.b16 %v1360, %v1358
    %v1379 = vpack.c.b16 %v1363, %v1361
    %v1380 = vpack.c.b16 %v1364, %v1362
    %1397 = vmatprep.subr.bf16.mxu0 %v1380
    %1398 = vmatpush1.bf16.msra.mxu0 %v1379
    %1399 = vmatprep.subr.bf16.mxu0 %v1378
    %1400 = vmatpush1.bf16.msra.mxu0 %v1377
    %1401 = vmatprep.subr.bf16.mxu0 %v1376
    %1402 = vmatpush1.bf16.msra.mxu0 %v1375
    %1403 = vmatprep.subr.bf16.mxu0 %v1374
    %1404 = vmatpush1.bf16.msra.mxu0 %v1373
    %1405 = vmatprep.subr.bf16.mxu0 %v1372
    %1406 = vmatpush1.bf16.msra.mxu0 %v1371
    %1407 = vmatprep.subr.bf16.mxu0 %v1370
    %1408 = vmatpush1.bf16.msra.mxu0 %v1369
    %1409 = vmatprep.subr.bf16.mxu0 %v1368
    %1410 = vmatpush1.bf16.msra.mxu0 %v1367
    %1411 = vmatprep.subr.bf16.mxu0 %v1366
    %1412 = vmatpush1.bf16.msra.mxu0 %v1365
    %1413 = vmatprep.subr.bf16.mxu0 0
    %1414 = vmatpush2.bf16.msra.mxu0 0
    %1415 = vmatprep.subr.bf16.mxu0 0
    %1416 = vmatpush2.bf16.msra.mxu0 0
    %1417 = vmatprep.subr.bf16.mxu0 0
    %1418 = vmatpush2.bf16.msra.mxu0 0
    %1419 = vmatprep.subr.bf16.mxu0 0
    %1420 = vmatpush2.bf16.msra.mxu0 0
    %1421 = vmatprep.subr.bf16.mxu0 0
    %1422 = vmatpush2.bf16.msra.mxu0 0
    %1423 = vmatprep.subr.bf16.mxu0 0
    %1424 = vmatpush2.bf16.msra.mxu0 0
    %1425 = vmatprep.subr.bf16.mxu0 0
    %1426 = vmatpush2.bf16.msra.mxu0 0
    %1427 = vmatprep.subr.bf16.mxu0 0
    %1428 = vmatpush2.bf16.msra.mxu0 0
    %1429 = vmatprep.mubr.bf16.mxu0 0
    %1430 = vmatmul.mubr.bf16.gmra.mxu0 %v1315
    %v1431 = vpop.f32.mrf.mxu0
    %v1432 = vadd.f32 %v1294, %v1431
    %v1433 = vpop.f32.mrf.mxu0
    %v1434 = vadd.f32 %v1298, %v1433
    %v1435 = vpop.f32.mrf.mxu0
    %v1436 = vpop.f32.mrf.mxu0
    %1437 = vdwg.mxu0
    %v1438 = vmul.f32 %v1432, 0.5
    %v1439 = vmul.f32 %v1434, 0.5
    %v1440 = vmul.f32 %v1432, 0.70710677
    %v1441 = vmul.f32 %v1434, 0.70710677
    %vm1442 = vcmp.ge.f32.partialorder %v1440, 0.0
    %vm1443 = vcmp.ge.f32.partialorder %v1441, 0.0
    %v1444 = vsel %vm1442, 1.0, -1.0
    %v1445 = vsel %vm1443, 1.0, -1.0
    %v1446 = vand.u32 2147483647, %v1440
    %v1447 = vand.u32 2147483647, %v1441
    %v1448 = vmul.f32 %v1446, 0.3275911
    %v1449 = vmul.f32 %v1447, 0.3275911
    %v1450 = vadd.f32 %v1448, 1.0
    %v1451 = vadd.f32 %v1449, 1.0
    %v1452 = vrcp.pop %v1450
    %v1453 = vmul.f32 1.0, %v1452
    %v1454 = vrcp.pop %v1451
    %v1455 = vmul.f32 1.0, %v1454
    %v1456 = vmul.f32 %v1453, 1.0614054
    %v1457 = vmul.f32 %v1455, 1.0614054
    %v1458 = vadd.f32 %v1456, -1.4531521
    %v1459 = vadd.f32 %v1457, -1.4531521
    %v1460 = vmul.f32 %v1458, %v1453
    %v1461 = vmul.f32 %v1459, %v1455
    %v1462 = vadd.f32 %v1460, 1.4214138
    %v1463 = vadd.f32 %v1461, 1.4214138
    %v1464 = vmul.f32 %v1462, %v1453
    %v1465 = vmul.f32 %v1463, %v1455
    %v1466 = vadd.f32 %v1464, -0.28449672
    %v1467 = vadd.f32 %v1465, -0.28449672
    %v1468 = vmul.f32 %v1466, %v1453
    %v1469 = vmul.f32 %v1467, %v1455
    %v1470 = vadd.f32 %v1468, 0.2548296
    %v1471 = vadd.f32 %v1469, 0.2548296
    %v1472 = vmul.f32 %v1470, %v1453
    %v1473 = vmul.f32 %v1471, %v1455
    %v1474 = vsub.f32 0.0, %v1446
    %v1475 = vsub.f32 0.0, %v1447
    %v1476 = vmul.f32 %v1474, %v1446
    %v1477 = vmul.f32 %v1475, %v1447
    %v1478 = vmul.f32 %v1476, 1.442695
    %v1479 = vpow.pop %v1478
    %v1480 = vmul.f32 %v1477, 1.442695
    %v1481 = vpow.pop %v1480
    %v1482 = vmul.f32 %v1472, %v1479
    %v1483 = vmul.f32 %v1473, %v1481
    %v1484 = vsub.f32 1.0, %v1482
    %v1485 = vsub.f32 1.0, %v1483
    %v1486 = vmul.f32 %v1444, %v1484
    %v1487 = vmul.f32 %v1445, %v1485
    %v1488 = vadd.f32 %v1486, 1.0
    %v1489 = vadd.f32 %v1487, 1.0
    %v1490 = vmul.f32 %v1438, %v1488
    %v1491 = vmul.f32 %v1439, %v1489
    %v1492 = vpack.c.bf16 %v1490, %v1490
    %v1493 = vpack.c.bf16 %v1491, %v1491
    %v1494 = vld [vmem:[#allocation14] sm:$0xf]
    %v1495 = vld [vmem:[#allocation14 + $0x4] sm:$0xf]
    %v1496 = vld [vmem:[#allocation14 + $0x8] sm:$0xf]
    %v1497 = vld [vmem:[#allocation14 + $0xc] sm:$0xf]
    %v1498 = vld [vmem:[#allocation14 + $0x10] sm:$0xf]
    %v1499 = vld [vmem:[#allocation14 + $0x14] sm:$0xf]
    %v1500 = vld [vmem:[#allocation14 + $0x18] sm:$0xf]
    %v1501 = vld [vmem:[#allocation14 + $0x1c] sm:$0xf]
    %v1502 = vld [vmem:[#allocation14 + $0x20] sm:$0xf]
    %v1503 = vld [vmem:[#allocation14 + $0x24] sm:$0xf]
    %v1504 = vld [vmem:[#allocation14 + $0x28] sm:$0xf]
    %v1505 = vld [vmem:[#allocation14 + $0x2c] sm:$0xf]
    %v1506 = vld [vmem:[#allocation14 + $0x30] sm:$0xf]
    %v1507 = vld [vmem:[#allocation14 + $0x34] sm:$0xf]
    %v1508 = vld [vmem:[#allocation14 + $0x38] sm:$0xf]
    %v1509 = vld [vmem:[#allocation14 + $0x3c] sm:$0xf]
    %v1510 = vld [vmem:[#allocation14 + $0x40] sm:$0xf]
    %v1511 = vld [vmem:[#allocation14 + $0x44] sm:$0xf]
    %v1512 = vld [vmem:[#allocation14 + $0x48] sm:$0xf]
    %v1513 = vld [vmem:[#allocation14 + $0x4c] sm:$0xf]
    %v1514 = vld [vmem:[#allocation14 + $0x50] sm:$0xf]
    %v1515 = vld [vmem:[#allocation14 + $0x54] sm:$0xf]
    %v1516 = vld [vmem:[#allocation14 + $0x58] sm:$0xf]
    %v1517 = vld [vmem:[#allocation14 + $0x5c] sm:$0xf]
    %v1518 = vld [vmem:[#allocation14 + $0x60] sm:$0xf]
    %v1519 = vld [vmem:[#allocation14 + $0x64] sm:$0xf]
    %v1520 = vld [vmem:[#allocation14 + $0x68] sm:$0xf]
    %v1521 = vld [vmem:[#allocation14 + $0x6c] sm:$0xf]
    %v1522 = vld [vmem:[#allocation14 + $0x70] sm:$0xf]
    %v1523 = vld [vmem:[#allocation14 + $0x74] sm:$0xf]
    %v1524 = vld [vmem:[#allocation14 + $0x78] sm:$0xf]
    %v1525 = vld [vmem:[#allocation14 + $0x7c] sm:$0xf]
    %v1526 = vlaneseq
    %v1527 = vshrl.u32 %v1526, 7
    %v1528 = vsub.s32 0, %v1527
    %v1529 = vrot.slane %v166, %v1528
    %v1562 = vunpack.c.l.b16 %v1494
    %v1563 = vunpack.c.l.b16 %v1495
    %v1564 = vunpack.c.l.b16 %v1496
    %v1565 = vunpack.c.l.b16 %v1497
    %v1566 = vunpack.c.l.b16 %v1498
    %v1567 = vunpack.c.l.b16 %v1499
    %v1568 = vunpack.c.l.b16 %v1500
    %v1569 = vunpack.c.l.b16 %v1501
    %v1570 = vunpack.c.l.b16 %v1502
    %v1571 = vunpack.c.l.b16 %v1503
    %v1572 = vunpack.c.l.b16 %v1504
    %v1573 = vunpack.c.l.b16 %v1505
    %v1574 = vunpack.c.l.b16 %v1506
    %v1575 = vunpack.c.l.b16 %v1507
    %v1576 = vunpack.c.l.b16 %v1508
    %v1577 = vunpack.c.l.b16 %v1509
    %v1578 = vunpack.c.l.b16 %v1510
    %v1579 = vunpack.c.l.b16 %v1511
    %v1580 = vunpack.c.l.b16 %v1512
    %v1581 = vunpack.c.l.b16 %v1513
    %v1582 = vunpack.c.l.b16 %v1514
    %v1583 = vunpack.c.l.b16 %v1515
    %v1584 = vunpack.c.l.b16 %v1516
    %v1585 = vunpack.c.l.b16 %v1517
    %v1586 = vunpack.c.l.b16 %v1518
    %v1587 = vunpack.c.l.b16 %v1519
    %v1588 = vunpack.c.l.b16 %v1520
    %v1589 = vunpack.c.l.b16 %v1521
    %v1590 = vunpack.c.l.b16 %v1522
    %v1591 = vunpack.c.l.b16 %v1523
    %v1592 = vunpack.c.l.b16 %v1524
    %v1593 = vunpack.c.l.b16 %v1525
    %v1594 = vpack.c.b16 %v1563, %v1562
    %v1595 = vpack.c.b16 %v1565, %v1564
    %v1596 = vpack.c.b16 %v1567, %v1566
    %v1597 = vpack.c.b16 %v1569, %v1568
    %v1598 = vpack.c.b16 %v1571, %v1570
    %v1599 = vpack.c.b16 %v1573, %v1572
    %v1600 = vpack.c.b16 %v1575, %v1574
    %v1601 = vpack.c.b16 %v1577, %v1576
    %v1602 = vpack.c.b16 %v1579, %v1578
    %v1603 = vpack.c.b16 %v1581, %v1580
    %v1604 = vpack.c.b16 %v1583, %v1582
    %v1605 = vpack.c.b16 %v1585, %v1584
    %v1606 = vpack.c.b16 %v1587, %v1586
    %v1607 = vpack.c.b16 %v1589, %v1588
    %v1608 = vpack.c.b16 %v1591, %v1590
    %v1609 = vpack.c.b16 %v1593, %v1592
    %1626 = vmatprep.subr.bf16.mxu0 0
    %1627 = vmatpush1.bf16.msra.mxu0 %v1601
    %1628 = vmatprep.subr.bf16.mxu0 0
    %1629 = vmatpush1.bf16.msra.mxu0 %v1600
    %1630 = vmatprep.subr.bf16.mxu0 0
    %1631 = vmatpush1.bf16.msra.mxu0 %v1599
    %1632 = vmatprep.subr.bf16.mxu0 0
    %1633 = vmatpush1.bf16.msra.mxu0 %v1598
    %1634 = vmatprep.subr.bf16.mxu0 0
    %1635 = vmatpush1.bf16.msra.mxu0 %v1597
    %1636 = vmatprep.subr.bf16.mxu0 0
    %1637 = vmatpush1.bf16.msra.mxu0 %v1596
    %1638 = vmatprep.subr.bf16.mxu0 0
    %1639 = vmatpush1.bf16.msra.mxu0 %v1595
    %1640 = vmatprep.subr.bf16.mxu0 0
    %1641 = vmatpush1.bf16.msra.mxu0 %v1594
    %1642 = vmatprep.subr.bf16.mxu0 0
    %1643 = vmatpush2.bf16.msra.mxu0 %v1609
    %1644 = vmatprep.subr.bf16.mxu0 0
    %1645 = vmatpush2.bf16.msra.mxu0 %v1608
    %1646 = vmatprep.subr.bf16.mxu0 0
    %1647 = vmatpush2.bf16.msra.mxu0 %v1607
    %1648 = vmatprep.subr.bf16.mxu0 0
    %1649 = vmatpush2.bf16.msra.mxu0 %v1606
    %1650 = vmatprep.subr.bf16.mxu0 0
    %1651 = vmatpush2.bf16.msra.mxu0 %v1605
    %1652 = vmatprep.subr.bf16.mxu0 0
    %1653 = vmatpush2.bf16.msra.mxu0 %v1604
    %1654 = vmatprep.subr.bf16.mxu0 0
    %1655 = vmatpush2.bf16.msra.mxu0 %v1603
    %1656 = vmatprep.subr.bf16.mxu0 0
    %1657 = vmatpush2.bf16.msra.mxu0 %v1602
    %1658 = vmatprep.mubr.bf16.mxu0 %v1493
    %1659 = vmatmul.mubr.bf16.gmra.mxu0 %v1492
    %v1660 = vpop.f32.mrf.mxu0
    %v1661 = vadd.f32 %v1529, %v1660
    %v1662 = vpop.f32.mrf.mxu0
    %v1663 = vpop.f32.mrf.mxu0
    %v1664 = vpop.f32.mrf.mxu0
    %1665 = vdwg.mxu0
    %v1667 = vrot.slane %v1661, 1
    %v1668 = vrot.slane %v1661, 2
    %v1669 = vrot.slane %v1661, 3
    %v1674 = vadd.f32 %v1265, %v1661
    %v1675 = vadd.f32 %v1266, %v1667
    %v1676 = vadd.f32 %v1267, %v1668
    %v1677 = vadd.f32 %v1268, %v1669
    %v1682 = vrot.slane %v1675, 7
    %v1683 = vsel %vm521, %v1682, %v1674
    %v1684 = vrot.slane %v1676, 6
    %v1685 = vsel %vm524, %v1684, %v1683
    %v1686 = vrot.slane %v1677, 5
    %v1687 = vsel %vm527, %v1686, %v1685
    %v1689 = vsel %vm869, %v1687, 0.0
    %1690 = vadd.xlane.f32.xlu0 %v1689
    %v1691 = vpop.xlane.xlu0 %1690
    %v1692 = vmul.f32 %v1691, %v183
    %v1693 = vmul.f32 %v1674, %v1674
    %v1694 = vmul.f32 %v1675, %v1675
    %v1695 = vmul.f32 %v1676, %v1676
    %v1696 = vmul.f32 %v1677, %v1677
    %v1701 = vrot.slane %v1694, 7
    %v1702 = vsel %vm521, %v1701, %v1693
    %v1703 = vrot.slane %v1695, 6
    %v1704 = vsel %vm524, %v1703, %v1702
    %v1705 = vrot.slane %v1696, 5
    %v1706 = vsel %vm527, %v1705, %v1704
    %v1708 = vsel %vm869, %v1706, 0.0
    %1709 = vadd.xlane.f32.xlu0 %v1708
    %v1710 = vpop.xlane.xlu0 %1709
    %v1711 = vmul.f32 %v1710, %v183
    %v1712 = vmul.f32 %v1692, %v1692
    %v1713 = vsub.f32 %v1711, %v1712
    %v1714 = vadd.f32 %v1713, 1e-12
    %v1715 = vrsqrt.pop %v1714
    %v1717 = vrot.slane %v1692, 1
    %v1718 = vrot.slane %v1692, 2
    %v1719 = vrot.slane %v1692, 3
    %v1724 = vsub.f32 %v1674, %v1692
    %v1725 = vsub.f32 %v1675, %v1717
    %v1726 = vsub.f32 %v1676, %v1718
    %v1727 = vsub.f32 %v1677, %v1719
    %v1729 = vrot.slane %v1715, 1
    %v1730 = vrot.slane %v1715, 2
    %v1731 = vrot.slane %v1715, 3
    %v1736 = vmul.f32 %v1724, %v1715
    %v1737 = vmul.f32 %v1725, %v1729
    %v1738 = vmul.f32 %v1726, %v1730
    %v1739 = vmul.f32 %v1727, %v1731
    %v1740 = vlaneseq
    %v1741 = vshrl.u32 %v1740, 7
    %v1742 = vsub.s32 1, %v1741
    %v1743 = vrot.slane %v166, %v1742
    %v1744 = vmul.f32 %v1736, %v1743
    %v1745 = vmul.f32 %v1737, %v1743
    %v1746 = vmul.f32 %v1738, %v1743
    %v1747 = vmul.f32 %v1739, %v1743
    %v1748 = vlaneseq
    %v1749 = vshrl.u32 %v1748, 7
    %v1750 = vsub.s32 2, %v1749
    %v1751 = vrot.slane %v166, %v1750
    %v1752 = vadd.f32 %v1744, %v1751
    %v1753 = vadd.f32 %v1745, %v1751
    %v1754 = vadd.f32 %v1746, %v1751
    %v1755 = vadd.f32 %v1747, %v1751
    %v1756 = vpack.c.bf16 %v1752, %v1752
    %v1757 = vpack.c.bf16 %v1753, %v1753
    %v1758 = vpack.c.bf16 %v1754, %v1754
    %v1759 = vpack.c.bf16 %v1755, %v1755
    %v1760 = vld [vmem:[#allocation16] sm:$0xf]
    %v1761 = vld [vmem:[#allocation16 + $0x4] sm:$0xf]
    %v1762 = vld [vmem:[#allocation16 + $0x8] sm:$0xf]
    %v1763 = vld [vmem:[#allocation16 + $0xc] sm:$0xf]
    %v1764 = vld [vmem:[#allocation16 + $0x10] sm:$0xf]
    %v1765 = vld [vmem:[#allocation16 + $0x14] sm:$0xf]
    %v1766 = vld [vmem:[#allocation16 + $0x18] sm:$0xf]
    %v1767 = vld [vmem:[#allocation16 + $0x1c] sm:$0xf]
    %v1768 = vld [vmem:[#allocation16 + $0x20] sm:$0xf]
    %v1769 = vld [vmem:[#allocation16 + $0x24] sm:$0xf]
    %v1770 = vld [vmem:[#allocation16 + $0x28] sm:$0xf]
    %v1771 = vld [vmem:[#allocation16 + $0x2c] sm:$0xf]
    %v1772 = vld [vmem:[#allocation16 + $0x30] sm:$0xf]
    %v1773 = vld [vmem:[#allocation16 + $0x34] sm:$0xf]
    %v1774 = vld [vmem:[#allocation16 + $0x38] sm:$0xf]
    %v1775 = vld [vmem:[#allocation16 + $0x3c] sm:$0xf]
    %v1776 = vld [vmem:[%s11] sm:$0x1]
    %v1778 = vlaneseq
    %v1779 = vshrl.u32 %v1778, 7
    %v1780 = vsub.s32 0, %v1779
    %v1781 = vrot.slane %v1776, %v1780
    %v1787 = vunpack.c.l.b16 %v1756
    %v1788 = vunpack.c.l.b16 %v1757
    %v1789 = vunpack.c.l.b16 %v1758
    %v1790 = vunpack.c.l.b16 %v1759
    %v1791 = vrot.slane %v1788, 7
    %v1792 = vsel %vm521, %v1791, %v1787
    %v1793 = vrot.slane %v1789, 6
    %v1794 = vsel %vm524, %v1793, %v1792
    %v1795 = vrot.slane %v1790, 5
    %v1796 = vsel %vm527, %v1795, %v1794
    %v1797 = vpack.c.b16 %v1796, %v1796
    %v1815 = vunpack.c.l.b16 %v1760
    %v1816 = vunpack.c.l.b16 %v1761
    %v1817 = vunpack.c.l.b16 %v1762
    %v1818 = vunpack.c.l.b16 %v1763
    %v1819 = vunpack.c.l.b16 %v1764
    %v1820 = vunpack.c.l.b16 %v1765
    %v1821 = vunpack.c.l.b16 %v1766
    %v1822 = vunpack.c.l.b16 %v1767
    %v1823 = vunpack.c.l.b16 %v1768
    %v1824 = vunpack.c.l.b16 %v1769
    %v1825 = vunpack.c.l.b16 %v1770
    %v1826 = vunpack.c.l.b16 %v1771
    %v1827 = vunpack.c.l.b16 %v1772
    %v1828 = vunpack.c.l.b16 %v1773
    %v1829 = vunpack.c.l.b16 %v1774
    %v1830 = vunpack.c.l.b16 %v1775
    %v1831 = vpack.c.b16 %v1816, %v1815
    %v1832 = vpack.c.b16 %v1818, %v1817
    %v1833 = vpack.c.b16 %v1820, %v1819
    %v1834 = vpack.c.b16 %v1822, %v1821
    %v1835 = vpack.c.b16 %v1824, %v1823
    %v1836 = vpack.c.b16 %v1826, %v1825
    %v1837 = vpack.c.b16 %v1828, %v1827
    %v1838 = vpack.c.b16 %v1830, %v1829
    %1847 = vmatprep.subr.bf16.mxu0 0
    %1848 = vmatpush1.bf16.msra.mxu0 %v1838
    %1849 = vmatprep.subr.bf16.mxu0 0
    %1850 = vmatpush1.bf16.msra.mxu0 %v1837
    %1851 = vmatprep.subr.bf16.mxu0 0
    %1852 = vmatpush1.bf16.msra.mxu0 %v1836
    %1853 = vmatprep.subr.bf16.mxu0 0
    %1854 = vmatpush1.bf16.msra.mxu0 %v1835
    %1855 = vmatprep.subr.bf16.mxu0 0
    %1856 = vmatpush1.bf16.msra.mxu0 %v1834
    %1857 = vmatprep.subr.bf16.mxu0 0
    %1858 = vmatpush1.bf16.msra.mxu0 %v1833
    %1859 = vmatprep.subr.bf16.mxu0 0
    %1860 = vmatpush1.bf16.msra.mxu0 %v1832
    %1861 = vmatprep.subr.bf16.mxu0 0
    %1862 = vmatpush1.bf16.msra.mxu0 %v1831
    %1863 = vmatprep.subr.bf16.mxu0 0
    %1864 = vmatpush2.bf16.msra.mxu0 0
    %1865 = vmatprep.subr.bf16.mxu0 0
    %1866 = vmatpush2.bf16.msra.mxu0 0
    %1867 = vmatprep.subr.bf16.mxu0 0
    %1868 = vmatpush2.bf16.msra.mxu0 0
    %1869 = vmatprep.subr.bf16.mxu0 0
    %1870 = vmatpush2.bf16.msra.mxu0 0
    %1871 = vmatprep.subr.bf16.mxu0 0
    %1872 = vmatpush2.bf16.msra.mxu0 0
    %1873 = vmatprep.subr.bf16.mxu0 0
    %1874 = vmatpush2.bf16.msra.mxu0 0
    %1875 = vmatprep.subr.bf16.mxu0 0
    %1876 = vmatpush2.bf16.msra.mxu0 0
    %1877 = vmatprep.subr.bf16.mxu0 0
    %1878 = vmatpush2.bf16.msra.mxu0 0
    %1879 = vmatprep.mubr.bf16.mxu0 0
    %1880 = vmatmul.mubr.bf16.gmra.mxu0 %v1797
    %v1881 = vpop.f32.mrf.mxu0
    %v1882 = vadd.f32 %v1781, %v1881
    %v1883 = vpop.f32.mrf.mxu0
    %v1884 = vpop.f32.mrf.mxu0
    %v1885 = vpop.f32.mrf.mxu0
    %1886 = vdwg.mxu0
    %v1889 = vunpack.c.l.s4 1966171168
    %v1890 = vunpack.c.0.s8 %v1889
    %v1891 = vlaneseq
    %v1892 = vshrl.u32 %v1891, 7
    %v1893 = vsub.s32 %v1890, %v1892
    %v1894 = vrot.slane %v1882, %v1893
    %v1895 = vcombine.high %v1894, %v1894
    %v1897 = vunpack.c.l.s4 1966171168
    %v1898 = vunpack.c.0.s8 %v1897
    %v1899 = vlaneseq
    %v1900 = vshrl.u32 %v1899, 7
    %v1901 = vsub.s32 %v1898, %v1900
    %v1902 = vrot.slane %v1894, %v1901
    %v1904 = vunpack.c.l.s4 1966171168
    %v1905 = vunpack.c.0.s8 %v1904
    %v1906 = vlaneseq
    %v1907 = vshrl.u32 %v1906, 7
    %v1908 = vsub.s32 %v1905, %v1907
    %v1909 = vrot.slane %v1895, %v1908
    %v1910 = vcombine.high %v1902, %v1902
    %v1911 = vcombine.high %v1909, %v1909
    %1916 = vst [vmem:[#allocation17] sm:$0x1] %v1902
    %1917 = vst [vmem:[#allocation17 + $0x1] sm:$0x1] %v1909
    %1918 = vst [vmem:[#allocation17 + $0x2] sm:$0x1] %v1910
    %1919 = vst [vmem:[#allocation17 + $0x3] sm:$0x1] %v1911
    // Predicated region
    $region86: #{tpu_custom_call.1} parent=1 // pred_check
      _
    $region87: #{tpu_custom_call.1} parent=1 // pred_check_branch
      %1921 = sbr.rel (0) target = $region89
    $region88: #{tpu_custom_call.1} parent=1 // pred_region
      %s1923 = ssub.s32 64, 64
      %1924 = vsyncadd [#allocation4], %s1923
      %s1925 = sshll.u32 [#allocation17], 4
      %s1926 = int_to_ptr.vmem [resolvable:$true] %s1925
      %1931 = dma.vmem_to_hbm [thread:$0]  %s1926, 64, %s12, [#allocation4], 16, 16, 1
    $region89: #{tpu_custom_call.1} parent=1 // pred_fallthru
      _
    // Predicated region
    $region90: #{tpu_custom_call.1} parent=1 // pred_check
      _
    $region91: #{tpu_custom_call.1} parent=1 // pred_check_branch
      %1933 = sbr.rel (0) target = $region93
    $region92: #{tpu_custom_call.1} parent=1 // pred_region
      %1934 = dma.done [#allocation4], 64
    $region93: #{tpu_custom_call.1} parent=1 // pred_fallthru
      _
    %1935 = vsyncpa [#allocation3], 1
    %1936 = vsyncpa [#allocation6], 1
    %1937 = vsyncpa [#allocation9], 1
    %1938 = vsyncpa [#allocation12], 1
    %1939 = vsyncpa [#allocation15], 1
    %1940 = vsyncpa [#allocation4], 1

</llo_original>
